<compile_context>
chip_gen: v7x
topology: tpu7x:2x2x1
jax: 0.10.0
libtpu: 0.0.40
codegen_flags: <defaults>
</compile_context>

<pallas_src>
import jax
import jax.numpy as jnp
from jax import lax
from jax.experimental import pallas as pl
from jax.experimental.pallas import tpu as pltpu

K = 3            # conv kernel size
EPS = 1e-5       # InstanceNorm3d default eps
NEG_SLOPE = 0.2  # LeakyReLU slope
CIN_ALIGN = 16   # bf16 sublane packing -> keeps the folded operand tile-aligned


def _round_up(x, m):
    return ((x + m - 1) // m) * m


def _pick_cout_tile(c_out):
    """Channel tile: multiple of 16, <= 64, dividing c_out (instance-norm is per-channel)."""
    for t in (64, 32, 16):
        if c_out % t == 0 and c_out > t:
            return t
    return c_out


def _vmem_limit_bytes(needed):
    """Accurate budget with headroom, capped per-chip (v7x has only 64 MiB per TC)."""
    cap = 64 << 20  # conservative default = v7x per-core VMEM
    try:
        info_fn = getattr(pltpu, "get_tpu_info", None)
        if info_fn is not None:
            cap = int(getattr(info_fn(), "vmem_capacity_bytes", cap))
    except Exception:
        pass
    return int(min(max(needed, 32 << 20), (cap * 3) // 4))


def _make_kernel(n_valid, Hp, Wp, Lpad):
    """Fused conv + instance-norm + leaky-relu for static shapes.

    Per grid step (one batch element x one C_out tile):
      x_ref : (1, C_in_pad, P_alloc)  bf16  flattened reflect-padded volume
      w_ref : (TC_out, 27*C_in_pad)   bf16  folded weights, col = ((kd*3+kh)*3+kw)*C_in_pad + ci
      m_ref : (1, Lpad)               f32   1.0 on valid (non-halo, non-pad) output lanes
      o_ref : (1, TC_out, Lpad)       bf16  normalized+activated output on the flat
                                            (d, h_pad, w_pad) grid (halo stripped on host)
    """

    def kernel(x_ref, w_ref, m_ref, o_ref):
        x = x_ref[0]                                           # (C_in_pad, P_alloc) bf16

        # ---- fold the 27 taps into the contraction: one (27*C_in_pad, Lpad) operand ----
        pieces = []
        for kd in range(K):
            for kh in range(K):
                for kw in range(K):
                    off = kd * Hp * Wp + kh * Wp + kw          # static lane offset
                    pieces.append(x[:, off:off + Lpad])        # (C_in_pad, Lpad)
        xs = jnp.concatenate(pieces, axis=0)                   # (27*C_in_pad, Lpad) bf16

        # single MXU matmul, f32 accumulate (contraction depth 27*C_in_pad)
        acc = jnp.dot(w_ref[...], xs, preferred_element_type=jnp.float32)  # (TC_out, Lpad)
        # NOTE: conv bias intentionally omitted — cancels under InstanceNorm(affine=False).

        # ---- InstanceNorm3d (affine=False), single-pass masked stats in f32 ----
        maskf = m_ref[...]                                     # (1, Lpad) f32
        inv_cnt = 1.0 / float(n_valid)
        am = acc * maskf                                       # halo/pad lanes -> 0
        mean = jnp.sum(am, axis=1, keepdims=True) * inv_cnt    # (TC_out, 1)
        ex2 = jnp.sum(am * am, axis=1, keepdims=True) * inv_cnt
        var = ex2 - mean * mean                                # f32: no catastrophic cancellation here
        yn = (acc - mean) * lax.rsqrt(var + EPS)

        # ---- LeakyReLU(0.2), bf16 lane-aligned full-width store ----
        out = jnp.where(yn >= 0, yn, NEG_SLOPE * yn)
        o_ref[0] = out.astype(o_ref.dtype)

    return kernel


@jax.jit
def conv3d_block(x, weight, bias):
    """x: (N, C_in, D, H, W) f32; weight: (C_out, C_in, 3, 3, 3); bias: (C_out,).

    Returns bf16 (N, C_out, D, H, W) — the downstream-friendly dtype (halves HBM writeback).
    """
    del bias  # algebraically cancelled by InstanceNorm(affine=False); kept for API parity
    N, C_in, D, H, W = x.shape
    C_out = weight.shape[0]
    Hp, Wp = H + 2, W + 2
    Lout = D * Hp * Wp                      # output on the (d, h_pad, w_pad) flat grid
    Lpad = _round_up(Lout, 128)             # 128-aligned lane extent (unmasked stores)
    max_off = 2 * Hp * Wp + 2 * Wp + 2      # largest static tap offset
    need_lanes = Lpad + max_off             # input lanes the shifted slices may touch

    C_in_pad = _round_up(C_in, CIN_ALIGN)

    # --- input prep: cast -> (optional) channel pad -> ONE reflect pad -> flatten -------
    xb = x.astype(jnp.bfloat16)
    if C_in_pad != C_in:                    # only small/odd channel counts pay this pass
        xb = jnp.pad(xb, ((0, 0), (0, C_in_pad - C_in), (0, 0), (0, 0), (0, 0)))

    base = (D + 2) * Hp * Wp
    extra_d = -(-max(need_lanes - base, 0) // (Hp * Wp))   # extra high-D rows for tail room
    if 1 + extra_d <= D - 1:
        # single fused pad: torch-exact reflect(1) everywhere; the extra high-D rows are
        # only ever read by discarded halo lanes.
        xp = jnp.pad(xb, ((0, 0), (0, 0), (1, 1 + extra_d), (1, 1), (1, 1)), mode="reflect")
        x_flat = xp.reshape(N, C_in_pad, (D + 2 + extra_d) * Hp * Wp)
    else:  # tiny-D fallback: reflect(1) + explicit zero tail
        xp = jnp.pad(xb, ((0, 0), (0, 0), (1, 1), (1, 1), (1, 1)), mode="reflect")
        x_flat = jnp.pad(xp.reshape(N, C_in_pad, base),
                         ((0, 0), (0, 0), (0, need_lanes - base)))
    P_alloc = x_flat.shape[-1]

    # --- folded weights: (C_out, 27*C_in_pad), col = ((kd*3+kh)*3+kw)*C_in_pad + ci ------
    TAPK = K * K * K * C_in_pad
    w_pad = jnp.pad(weight, ((0, 0), (0, C_in_pad - C_in), (0, 0), (0, 0), (0, 0)))
    w_fold = jnp.transpose(w_pad, (0, 2, 3, 4, 1)).reshape(C_out, TAPK).astype(jnp.bfloat16)

    # --- validity mask over the 128-padded flat output grid (halo + pad lanes excluded) --
    p = jnp.arange(Lpad)
    valid = (p < Lout) & ((p % Wp) < W) & (((p // Wp) % Hp) < H)
    mask = valid.astype(jnp.float32).reshape(1, Lpad)

    TC_out = _pick_cout_tile(C_out)
    n_ct = C_out // TC_out

    # --- VMEM budget: double-buffered blocks + the live folded operand / f32 accumulator -
    blk_bytes = (C_in_pad * P_alloc * 2      # x block (bf16)
                 + TC_out * TAPK * 2         # weight block (bf16)
                 + Lpad * 4                  # mask block (f32)
                 + TC_out * Lpad * 2)        # output block (bf16)
    live_bytes = TAPK * Lpad * 2 + TC_out * Lpad * 4
    needed = 2 * blk_bytes + live_bytes + (4 << 20)
    vmem_limit = _vmem_limit_bytes(needed)

    out_flat = pl.pallas_call(
        _make_kernel(D * H * W, Hp, Wp, Lpad),
        out_shape=jax.ShapeDtypeStruct((N, C_out, Lpad), jnp.bfloat16),
        grid_spec=pltpu.PrefetchScalarGridSpec(
            num_scalar_prefetch=0,
            grid=(N, n_ct),
            in_specs=[
                pl.BlockSpec((1, C_in_pad, P_alloc), lambda n, c: (n, 0, 0)),
                pl.BlockSpec((TC_out, TAPK), lambda n, c: (c, 0)),
                # grid-invariant; Pallas keeps the block resident (index never changes).
                pl.BlockSpec((1, Lpad), lambda n, c: (0, 0)),
            ],
            out_specs=pl.BlockSpec((1, TC_out, Lpad), lambda n, c: (n, c, 0)),
        ),
        compiler_params=pltpu.CompilerParams(
            dimension_semantics=("parallel", "parallel"),
            vmem_limit_bytes=vmem_limit,
        ),
    )(x_flat, w_fold, mask)

    # strip padded lanes + (H, W) halo; already channel-major -> single slice, no transpose
    out = out_flat[:, :, :Lout].reshape(N, C_out, D, Hp, Wp)[:, :, :, :H, :W]
    return out


def _reference(x, weight, bias, match_bf16=False):
    """Pure-JAX reference of the PyTorch Conv3D block forward (f32)."""
    xp = jnp.pad(x, ((0, 0), (0, 0), (1, 1), (1, 1), (1, 1)), mode="reflect")
    w = weight
    if match_bf16:  # mirror the kernel's bf16 operands / f32 accumulate
        xp = xp.astype(jnp.bfloat16).astype(jnp.float32)
        w = w.astype(jnp.bfloat16).astype(jnp.float32)
    y = lax.conv_general_dilated(
        xp, w, window_strides=(1, 1, 1), padding="VALID",
        dimension_numbers=("NCDHW", "OIDHW", "NCDHW"),
    ) + bias.reshape(1, -1, 1, 1, 1)
    mean = jnp.mean(y, axis=(2, 3, 4), keepdims=True)
    var = jnp.mean((y - mean) ** 2, axis=(2, 3, 4), keepdims=True)
    yn = (y - mean) / jnp.sqrt(var + EPS)
    return jnp.where(yn >= 0, yn, NEG_SLOPE * yn)


if __name__ == "__main__":
    # small shapes consistent with the module's Conv3D blocks (basic_dims=8)
    N, C_in, C_out = 2, 4, 8
    D = H = W = 8

    key = jax.random.PRNGKey(0)
    kx, kw, kb = jax.random.split(key, 3)
    x = jax.random.normal(kx, (N, C_in, D, H, W), dtype=jnp.float32)
    weight = 0.1 * jax.random.normal(kw, (C_out, C_in, K, K, K), dtype=jnp.float32)
    bias = 0.1 * jax.random.normal(kb, (C_out,), dtype=jnp.float32)

    out = jax.block_until_ready(conv3d_block(x, weight, bias))
    assert out.shape == (N, C_out, D, H, W)
    assert out.dtype == jnp.bfloat16
    out_f32 = out.astype(jnp.float32)

    # check vs a reference with matched (bf16-operand, f32-accumulate) numerics
    ref_m = jax.block_until_ready(_reference(x, weight, bias, match_bf16=True))
    assert jnp.allclose(out_f32, ref_m, atol=5e-2, rtol=5e-2), "mismatch vs matched reference"

    # sanity check vs the pure-f32 PyTorch-equivalent math
    ref_f = jax.block_until_ready(_reference(x, weight, bias, match_bf16=False))
    assert jnp.allclose(out_f32, ref_f, atol=2e-1, rtol=2e-1), "mismatch vs f32 reference"

    print("KERNEL_OK")
</pallas_src>

<mosaic_0001>
module attributes {stable_mosaic.version = 11 : i64} {
  func.func @kernel(%arg0: i32, %arg1: i32, %arg2: memref<1x16x1200xbf16, #tpu.memory_space<vmem>>, %arg3: memref<8x432xbf16, #tpu.memory_space<vmem>>, %arg4: memref<1x896xf32, #tpu.memory_space<vmem>>, %arg5: memref<1x8x896xbf16, #tpu.memory_space<vmem>>) attributes {dimension_semantics = [#tpu.dimension_semantics<parallel>, #tpu.dimension_semantics<parallel>], iteration_bounds = array<i64: 2, 1>, scalar_prefetch = 0 : i64, scratch_operands = 0 : i64, tpu.core_type = #tpu.core_type<tc>, window_params = [{transform_indices = @transform_0, window_bounds = array<i64: 1, 16, 1200>}, {transform_indices = @transform_1, window_bounds = array<i64: 8, 432>}, {pipeline_mode = #tpu.pipeline_mode<synchronous>, transform_indices = @transform_2, window_bounds = array<i64: 1, 896>}, {transform_indices = @transform_3, window_bounds = array<i64: 1, 8, 896>}]} {
    %c0 = arith.constant 0 : index
    %c0_0 = arith.constant 0 : index
    %c0_1 = arith.constant 0 : index
    %0 = vector.load %arg2[%c0, %c0_0, %c0_1] : memref<1x16x1200xbf16, #tpu.memory_space<vmem>>, vector<1x16x1200xbf16>
    %1 = vector.shape_cast %0 : vector<1x16x1200xbf16> to vector<16x1200xbf16>
    %2 = vector.extract_strided_slice %1 {offsets = [0, 0], sizes = [16, 896], strides = [1, 1]} : vector<16x1200xbf16> to vector<16x896xbf16>
    %3 = vector.extract_strided_slice %1 {offsets = [0, 1], sizes = [16, 896], strides = [1, 1]} : vector<16x1200xbf16> to vector<16x896xbf16>
    %4 = vector.extract_strided_slice %1 {offsets = [0, 2], sizes = [16, 896], strides = [1, 1]} : vector<16x1200xbf16> to vector<16x896xbf16>
    %5 = vector.extract_strided_slice %1 {offsets = [0, 10], sizes = [16, 896], strides = [1, 1]} : vector<16x1200xbf16> to vector<16x896xbf16>
    %6 = vector.extract_strided_slice %1 {offsets = [0, 11], sizes = [16, 896], strides = [1, 1]} : vector<16x1200xbf16> to vector<16x896xbf16>
    %7 = vector.extract_strided_slice %1 {offsets = [0, 12], sizes = [16, 896], strides = [1, 1]} : vector<16x1200xbf16> to vector<16x896xbf16>
    %8 = vector.extract_strided_slice %1 {offsets = [0, 20], sizes = [16, 896], strides = [1, 1]} : vector<16x1200xbf16> to vector<16x896xbf16>
    %9 = vector.extract_strided_slice %1 {offsets = [0, 21], sizes = [16, 896], strides = [1, 1]} : vector<16x1200xbf16> to vector<16x896xbf16>
    %10 = vector.extract_strided_slice %1 {offsets = [0, 22], sizes = [16, 896], strides = [1, 1]} : vector<16x1200xbf16> to vector<16x896xbf16>
    %11 = vector.extract_strided_slice %1 {offsets = [0, 100], sizes = [16, 896], strides = [1, 1]} : vector<16x1200xbf16> to vector<16x896xbf16>
    %12 = vector.extract_strided_slice %1 {offsets = [0, 101], sizes = [16, 896], strides = [1, 1]} : vector<16x1200xbf16> to vector<16x896xbf16>
    %13 = vector.extract_strided_slice %1 {offsets = [0, 102], sizes = [16, 896], strides = [1, 1]} : vector<16x1200xbf16> to vector<16x896xbf16>
    %14 = vector.extract_strided_slice %1 {offsets = [0, 110], sizes = [16, 896], strides = [1, 1]} : vector<16x1200xbf16> to vector<16x896xbf16>
    %15 = vector.extract_strided_slice %1 {offsets = [0, 111], sizes = [16, 896], strides = [1, 1]} : vector<16x1200xbf16> to vector<16x896xbf16>
    %16 = vector.extract_strided_slice %1 {offsets = [0, 112], sizes = [16, 896], strides = [1, 1]} : vector<16x1200xbf16> to vector<16x896xbf16>
    %17 = vector.extract_strided_slice %1 {offsets = [0, 120], sizes = [16, 896], strides = [1, 1]} : vector<16x1200xbf16> to vector<16x896xbf16>
    %18 = vector.extract_strided_slice %1 {offsets = [0, 121], sizes = [16, 896], strides = [1, 1]} : vector<16x1200xbf16> to vector<16x896xbf16>
    %19 = vector.extract_strided_slice %1 {offsets = [0, 122], sizes = [16, 896], strides = [1, 1]} : vector<16x1200xbf16> to vector<16x896xbf16>
    %20 = vector.extract_strided_slice %1 {offsets = [0, 200], sizes = [16, 896], strides = [1, 1]} : vector<16x1200xbf16> to vector<16x896xbf16>
    %21 = vector.extract_strided_slice %1 {offsets = [0, 201], sizes = [16, 896], strides = [1, 1]} : vector<16x1200xbf16> to vector<16x896xbf16>
    %22 = vector.extract_strided_slice %1 {offsets = [0, 202], sizes = [16, 896], strides = [1, 1]} : vector<16x1200xbf16> to vector<16x896xbf16>
    %23 = vector.extract_strided_slice %1 {offsets = [0, 210], sizes = [16, 896], strides = [1, 1]} : vector<16x1200xbf16> to vector<16x896xbf16>
    %24 = vector.extract_strided_slice %1 {offsets = [0, 211], sizes = [16, 896], strides = [1, 1]} : vector<16x1200xbf16> to vector<16x896xbf16>
    %25 = vector.extract_strided_slice %1 {offsets = [0, 212], sizes = [16, 896], strides = [1, 1]} : vector<16x1200xbf16> to vector<16x896xbf16>
    %26 = vector.extract_strided_slice %1 {offsets = [0, 220], sizes = [16, 896], strides = [1, 1]} : vector<16x1200xbf16> to vector<16x896xbf16>
    %27 = vector.extract_strided_slice %1 {offsets = [0, 221], sizes = [16, 896], strides = [1, 1]} : vector<16x1200xbf16> to vector<16x896xbf16>
    %28 = vector.extract_strided_slice %1 {offsets = [0, 222], sizes = [16, 896], strides = [1, 1]} : vector<16x1200xbf16> to vector<16x896xbf16>
    %29 = tpu.concatenate %2, %3, %4, %5, %6, %7, %8, %9, %10, %11, %12, %13, %14, %15, %16, %17 in 0 : vector<16x896xbf16>, vector<16x896xbf16>, vector<16x896xbf16>, vector<16x896xbf16>, vector<16x896xbf16>, vector<16x896xbf16>, vector<16x896xbf16>, vector<16x896xbf16>, vector<16x896xbf16>, vector<16x896xbf16>, vector<16x896xbf16>, vector<16x896xbf16>, vector<16x896xbf16>, vector<16x896xbf16>, vector<16x896xbf16>, vector<16x896xbf16> -> vector<256x896xbf16>
    %30 = tpu.concatenate %18, %19, %20, %21, %22, %23, %24, %25, %26, %27, %28 in 0 : vector<16x896xbf16>, vector<16x896xbf16>, vector<16x896xbf16>, vector<16x896xbf16>, vector<16x896xbf16>, vector<16x896xbf16>, vector<16x896xbf16>, vector<16x896xbf16>, vector<16x896xbf16>, vector<16x896xbf16>, vector<16x896xbf16> -> vector<176x896xbf16>
    %31 = tpu.concatenate %29, %30 in 0 : vector<256x896xbf16>, vector<176x896xbf16> -> vector<432x896xbf16>
    %c0_2 = arith.constant 0 : index
    %c0_3 = arith.constant 0 : index
    %32 = vector.load %arg3[%c0_2, %c0_3] : memref<8x432xbf16, #tpu.memory_space<vmem>>, vector<8x432xbf16>
    %cst = arith.constant dense<0.000000e+00> : vector<8x896xf32>
    %33 = tpu.matmul %32, %31, %cst {dimension_numbers = #tpu.dot_dimension_numbers<[1], [0], [0], [1], [0, 0, 1, 1], [], []>} : vector<8x432xbf16>, vector<432x896xbf16>, vector<8x896xf32> -> vector<8x896xf32>
    %c0_4 = arith.constant 0 : index
    %c0_5 = arith.constant 0 : index
    %34 = vector.load %arg4[%c0_4, %c0_5] : memref<1x896xf32, #tpu.memory_space<vmem>>, vector<1x896xf32>
    %35 = vector.broadcast %34 : vector<1x896xf32> to vector<8x896xf32>
    %36 = arith.mulf %33, %35 : vector<8x896xf32>
    %cst_6 = arith.constant dense<0.000000e+00> : vector<8xf32>
    %37 = vector.multi_reduction <add>, %36, %cst_6 [1] : vector<8x896xf32> to vector<8xf32>
    %38 = vector.shape_cast %37 : vector<8xf32> to vector<8x1xf32>
    %cst_7 = arith.constant 0.001953125 : f32
    %39 = vector.broadcast %cst_7 : f32 to vector<8x1xf32>
    %40 = arith.mulf %38, %39 : vector<8x1xf32>
    %41 = arith.mulf %36, %36 : vector<8x896xf32>
    %cst_8 = arith.constant dense<0.000000e+00> : vector<8xf32>
    %42 = vector.multi_reduction <add>, %41, %cst_8 [1] : vector<8x896xf32> to vector<8xf32>
    %43 = vector.shape_cast %42 : vector<8xf32> to vector<8x1xf32>
    %cst_9 = arith.constant 0.001953125 : f32
    %44 = vector.broadcast %cst_9 : f32 to vector<8x1xf32>
    %45 = arith.mulf %43, %44 : vector<8x1xf32>
    %46 = arith.mulf %40, %40 : vector<8x1xf32>
    %47 = arith.subf %45, %46 : vector<8x1xf32>
    %48 = vector.broadcast %40 : vector<8x1xf32> to vector<8x896xf32>
    %49 = arith.subf %33, %48 : vector<8x896xf32>
    %cst_10 = arith.constant 9.99999974E-6 : f32
    %50 = vector.broadcast %cst_10 : f32 to vector<8x1xf32>
    %51 = arith.addf %47, %50 : vector<8x1xf32>
    %52 = math.rsqrt %51 : vector<8x1xf32>
    %53 = vector.broadcast %52 : vector<8x1xf32> to vector<8x896xf32>
    %54 = arith.mulf %49, %53 : vector<8x896xf32>
    %cst_11 = arith.constant 0.000000e+00 : f32
    %55 = vector.broadcast %cst_11 : f32 to vector<8x896xf32>
    %56 = arith.cmpf oge, %54, %55 : vector<8x896xf32>
    %cst_12 = arith.constant 2.000000e-01 : f32
    %57 = vector.broadcast %cst_12 : f32 to vector<8x896xf32>
    %58 = arith.mulf %57, %54 : vector<8x896xf32>
    %59 = arith.select %56, %54, %58 : vector<8x896xi1>, vector<8x896xf32>
    %60 = arith.truncf %59 : vector<8x896xf32> to vector<8x896xbf16>
    %c0_13 = arith.constant 0 : index
    %c0_14 = arith.constant 0 : index
    %c0_15 = arith.constant 0 : index
    %61 = vector.load %arg5[%c0_13, %c0_14, %c0_15] : memref<1x8x896xbf16, #tpu.memory_space<vmem>>, vector<1x8x896xbf16>
    %62 = vector.shape_cast %61 : vector<1x8x896xbf16> to vector<8x896xbf16>
    %63 = vector.shape_cast %60 : vector<8x896xbf16> to vector<1x8x896xbf16>
    tpu.vector_store %arg5[%c0_13, %c0_14, %c0_15], %63 {strides = array<i32>} : memref<1x8x896xbf16, #tpu.memory_space<vmem>>, vector<1x8x896xbf16>,
    return
  }
  func.func @transform_0(%arg0: i32, %arg1: i32) -> (i32, i32, i32) {
    %c0_i32 = arith.constant 0 : i32
    %c0_i32_0 = arith.constant 0 : i32
    %c0_i32_1 = arith.constant 0 : i32
    return %arg0, %c0_i32, %c0_i32_0 : i32, i32, i32
  }
  func.func @transform_1(%arg0: i32, %arg1: i32) -> (i32, i32) {
    %c0_i32 = arith.constant 0 : i32
    %c0_i32_0 = arith.constant 0 : i32
    return %arg1, %c0_i32 : i32, i32
  }
  func.func @transform_2(%arg0: i32, %arg1: i32) -> (i32, i32) {
    %c0_i32 = arith.constant 0 : i32
    %c0_i32_0 = arith.constant 0 : i32
    %c0_i32_1 = arith.constant 0 : i32
    return %c0_i32, %c0_i32_0 : i32, i32
  }
  func.func @transform_3(%arg0: i32, %arg1: i32) -> (i32, i32, i32) {
    %c0_i32 = arith.constant 0 : i32
    %c0_i32_0 = arith.constant 0 : i32
    return %arg0, %arg1, %c0_i32 : i32, i32, i32
  }
}

</mosaic_0001>

<llo_original>
// kernel: conv3d_block.1
$region0: #{conv3d_block.1}
  #allocation0 [shape = 'u32[]', space=smem, size = 0x4, offset = 0x4, fixed_abs, tag = 'smem constant byte address 0x4 - core index']
  #allocation1 [shape = 'u32[144,128]{1,0:T(1,128)}', space=vmem, size = 0x12000, scoped, tag = 'internal scratch']
  %s0 = inlined_call_operand.vmem [shape: bf16[2,16,1200], index: 0, kind: input, shape index: {}]
  %s1 = inlined_call_operand.vmem [shape: bf16[8,432], index: 1, kind: input, shape index: {}]
  %s2 = inlined_call_operand.vmem [shape: f32[1,896], index: 2, kind: input, shape index: {}]
  %s3 = inlined_call_operand.vmem [shape: bf16[2,8,896], index: 3, kind: output, shape index: {}]
  %s4 = sld [smem:[#allocation0]]
  $region45: #{conv3d_block.1} parent=0
    _
  %s6 = ssub.s32 1, %s4
  %s7 = scalar_select 0, %s6, %s4
  loop: start=0, step=1, limit=4
  $region2: #{conv3d_block.1} parent=0 // loop_pre_header
    _
  $region3: #{conv3d_block.1} parent=0 // loop_header
    %s9 = sphi 0, %s13
    %p10 = scmp.ge.s32.totalorder %s9, 4
    %s16 = sphi 0, %s28
    %s17 = sphi 0, %s24
    %s18 = sphi 0, %s16
    %s19 = sphi 0, %s17
    %s20 = sphi 0, %s18
    %s21 = sphi 0, %s19
    %s31 = sphi 0, %s33
    %s34 = sphi 0, %s31
    %s35 = sphi 0, %s34
    %s51 = sphi 0, %s35
    %s57 = sphi 0, %s59
    %s60 = sphi 0, %s57
    %s61 = sphi 0, %s60
    %s77 = sphi 0, %s61
    %s81 = sphi 0, %s81
    %s83 = sphi 0, %s81
    %s84 = sphi 0, %s83
    %s98 = sphi 0, %s84
    %s106 = sphi 0, %s108
    %s109 = sphi 0, %s106
    %s110 = sphi 0, %s109
    %s126 = sphi 0, %s110
  $region4: #{conv3d_block.1} parent=0 // loop_header_branch
    %12 = sbr.rel (%p10) target = $region8
  $region5: #{conv3d_block.1} parent=0 // loop_body
    %s14 = ssub.s32 %s9, 1
    %s15 = ssub.s32 %s9, 2
    %s22 = sadd.s32 1, %s17
    %p23 = scmp.ge.s32.totalorder %s22, 1
    %s24 = scalar_select %p23, 0, %s22
    %s25 = sadd.s32 1, %s16
    %s26 = scalar_select %p23, %s25, %s16
    %p27 = scmp.ge.s32.totalorder %s26, 2
    %s28 = scalar_select %p27, 0, %s26
    %s29 = ssub.s32 %s16, %s28
    %p30 = scmp.eq.s32.totalorder %s29, 0
    %s32 = sadd.s32 %s31, 1
    %s33 = scalar_select %p30, %s31, %s32
    %p36 = pneg %p30
    %p37 = scmp.eq.s32.totalorder %s9, 1
    %p38 = por %p36, %p37
    %p39 = scmp.ne.s32.totalorder %s31, %s34
    %p40 = scmp.eq.s32.totalorder %s9, 0
    %p41 = por %p39, %p40
    %p42 = scmp.ne.s32.totalorder %s31, %s34
    %p43 = scmp.eq.s32.totalorder %s14, 1
    %p44 = por %p42, %p43
    %p45 = scmp.ne.s32.totalorder %s34, %s35
    %p46 = scmp.eq.s32.totalorder %s14, 0
    %p47 = por %p45, %p46
    %p48 = scmp.ne.s32.totalorder %s34, %s35
    %p49 = scmp.eq.s32.totalorder %s15, 1
    %p50 = por %p48, %p49
    %p52 = scmp.ne.s32.totalorder %s35, %s51
    %p53 = scmp.eq.s32.totalorder %s15, 0
    %p54 = por %p52, %p53
    %s55 = ssub.s32 %s17, %s24
    %p56 = scmp.eq.s32.totalorder %s55, 0
    %s58 = sadd.s32 %s57, 1
    %s59 = scalar_select %p56, %s57, %s58
    %p62 = pneg %p56
    %p63 = scmp.eq.s32.totalorder %s9, 1
    %p64 = por %p62, %p63
    %p65 = scmp.ne.s32.totalorder %s57, %s60
    %p66 = scmp.eq.s32.totalorder %s9, 0
    %p67 = por %p65, %p66
    %p68 = scmp.ne.s32.totalorder %s57, %s60
    %p69 = scmp.eq.s32.totalorder %s14, 1
    %p70 = por %p68, %p69
    %p71 = scmp.ne.s32.totalorder %s60, %s61
    %p72 = scmp.eq.s32.totalorder %s14, 0
    %p73 = por %p71, %p72
    %p74 = scmp.ne.s32.totalorder %s60, %s61
    %p75 = scmp.eq.s32.totalorder %s15, 1
    %p76 = por %p74, %p75
    %p78 = scmp.ne.s32.totalorder %s61, %s77
    %p79 = scmp.eq.s32.totalorder %s15, 0
    %p80 = por %p78, %p79
    %s82 = sadd.s32 %s81, 1
    %p85 = scmp.eq.s32.totalorder %s9, 1
    %p86 = scmp.ne.s32.totalorder %s81, %s83
    %p87 = scmp.eq.s32.totalorder %s9, 0
    %p88 = por %p86, %p87
    %p89 = scmp.ne.s32.totalorder %s81, %s83
    %p90 = scmp.eq.s32.totalorder %s14, 1
    %p91 = por %p89, %p90
    %p92 = scmp.ne.s32.totalorder %s83, %s84
    %p93 = scmp.eq.s32.totalorder %s14, 0
    %p94 = por %p92, %p93
    %p95 = scmp.ne.s32.totalorder %s83, %s84
    %p96 = scmp.eq.s32.totalorder %s15, 1
    %p97 = por %p95, %p96
    %p99 = scmp.ne.s32.totalorder %s84, %s98
    %p100 = scmp.eq.s32.totalorder %s15, 0
    %p101 = por %p99, %p100
    %s102 = ssub.s32 %s16, %s28
    %s103 = ssub.s32 %s17, %s24
    %s104 = sor.u32 %s102, %s103
    %p105 = scmp.eq.s32.totalorder %s104, 0
    %s107 = sadd.s32 %s106, 1
    %s108 = scalar_select %p105, %s106, %s107
    %p111 = pneg %p105
    %p112 = scmp.eq.s32.totalorder %s9, 1
    %p113 = por %p111, %p112
    %p114 = scmp.ne.s32.totalorder %s106, %s109
    %p115 = scmp.eq.s32.totalorder %s9, 0
    %p116 = por %p114, %p115
    %p117 = scmp.ne.s32.totalorder %s106, %s109
    %p118 = scmp.eq.s32.totalorder %s14, 1
    %p119 = por %p117, %p118
    %p120 = scmp.ne.s32.totalorder %s109, %s110
    %p121 = scmp.eq.s32.totalorder %s14, 0
    %p122 = por %p120, %p121
    %p123 = scmp.ne.s32.totalorder %s109, %s110
    %p124 = scmp.eq.s32.totalorder %s15, 1
    %p125 = por %p123, %p124
    %p127 = scmp.ne.s32.totalorder %s110, %s126
    %p128 = scmp.eq.s32.totalorder %s15, 0
    %p129 = por %p127, %p128
    %p130 = scmp.le.s32.totalorder 1, %s9
    %p131 = scmp.lt.s32.totalorder %s9, 3
    %p132 = pnand %p130, %p131
    %p133 = pneg %p132
    // Predicated region
    $region9: #{conv3d_block.1} parent=5 // pred_check
      _
    $region10: #{conv3d_block.1} parent=5 // pred_check_branch
      %135 = sbr.rel (%p132) target = $region12
    $region11: #{conv3d_block.1} parent=5 // pred_region
      %s136 = ssub.s32 %s9, 1
      // Predicated region
      $region13: #{conv3d_block.1} parent=11 // pred_check
        %p137 = pneg %p73
      $region14: #{conv3d_block.1} parent=11 // pred_check_branch
        %139 = sbr.rel (%p137) target = $region16
      $region15: #{conv3d_block.1} parent=11 // pred_region
        %p140 = scmp.lt.s32.totalorder %s19, 0
        %s141 = scalar_select %p140, %s19, 0
        %s142 = smul.addr %s141, 4
        %s143 = smul.addr %s142, 4
        %s144 = scalar_lea.vmem %s1, %s143
      $region16: #{conv3d_block.1} parent=11 // pred_fallthru
        _
      // Predicated region
      $region17: #{conv3d_block.1} parent=11 // pred_check
        %p145 = pneg %p94
      $region18: #{conv3d_block.1} parent=11 // pred_check_branch
        %147 = sbr.rel (%p145) target = $region20
      $region19: #{conv3d_block.1} parent=11 // pred_region
        _
      $region20: #{conv3d_block.1} parent=11 // pred_fallthru
        _
    $region12: #{conv3d_block.1} parent=5 // pred_fallthru
      _
    %p148 = scmp.lt.s32.totalorder %s9, 2
    // Predicated region
    $region21: #{conv3d_block.1} parent=5 // pred_check
      %p149 = pneg %p148
    $region22: #{conv3d_block.1} parent=5 // pred_check_branch
      %151 = sbr.rel (%p149) target = $region24
    $region23: #{conv3d_block.1} parent=5 // pred_region
      // Predicated region
      $region25: #{conv3d_block.1} parent=23 // pred_check
        %p152 = pneg %p41
      $region26: #{conv3d_block.1} parent=23 // pred_check_branch
        %154 = sbr.rel (%p152) target = $region28
      $region27: #{conv3d_block.1} parent=23 // pred_region
        %p155 = scmp.lt.s32.totalorder %s16, 1
        %s156 = scalar_select %p155, %s16, 1
        %s157 = smul.addr %s156, 20
        %s158 = smul.addr %s157, 4
        %s159 = scalar_lea.vmem %s0, %s158
      $region28: #{conv3d_block.1} parent=23 // pred_fallthru
        _
    $region24: #{conv3d_block.1} parent=5 // pred_fallthru
      _
    %p160 = scmp.le.s32.totalorder 1, %s9
    %p161 = scmp.lt.s32.totalorder %s9, 3
    %p162 = pnand %p160, %p161
    %p163 = pneg %p162
    // Predicated region
    $region29: #{conv3d_block.1} parent=5 // pred_check
      _
    $region30: #{conv3d_block.1} parent=5 // pred_check_branch
      %165 = sbr.rel (%p162) target = $region32
    $region31: #{conv3d_block.1} parent=5 // pred_region
      %s166 = ssub.s32 %s9, 1
      %p167 = scmp.lt.s32.totalorder %s18, 1
      %s168 = scalar_select %p167, %s18, 1
      %s169 = smul.addr %s168, 20
      %s170 = smul.addr %s169, 4
      %s171 = scalar_lea.vmem %s0, %s170
      %p172 = pneg %p47
      %p173 = pneg %p44
      %p174 = scmp.lt.s32.totalorder %s19, 0
      %s175 = scalar_select %p174, %s19, 0
      %s176 = smul.addr %s175, 4
      %s177 = smul.addr %s176, 4
      %s178 = scalar_lea.vmem %s1, %s177
      %p179 = pneg %p73
      %p180 = pneg %p70
      %p181 = pneg %p94
      %p182 = pneg %p91
      %p183 = pneg %p122
      %p184 = pneg %p119
      %p185 = scmp.lt.s32.totalorder %s18, 1
      %s186 = scalar_select %p185, %s18, 1
      %p187 = scmp.lt.s32.totalorder %s19, 0
      %s188 = scalar_select %p187, %s19, 0
      %s189 = smul.addr %s188, 7
      %s190 = smul.addr %s186, 7
      %s191 = sadd.s32 %s189, %s190
      %s192 = smul.addr %s191, 4
      %s193 = scalar_lea.vmem %s3, %s192
      %p194 = scmp.lt.s32.totalorder %s18, 1
      %s195 = scalar_select %p194, %s18, 1
      %s196 = smul.addr %s195, 20
      %s197 = smul.addr %s196, 4
      %s198 = scalar_lea.vmem %s0, %s197
      %p199 = scmp.lt.s32.totalorder %s19, 0
      %s200 = scalar_select %p199, %s19, 0
      %s201 = smul.addr %s200, 4
      %s202 = smul.addr %s201, 4
      %s203 = scalar_lea.vmem %s1, %s202
      %p204 = scmp.lt.s32.totalorder %s18, 1
      %s205 = scalar_select %p204, %s18, 1
      %p206 = scmp.lt.s32.totalorder %s19, 0
      %s207 = scalar_select %p206, %s19, 0
      %s208 = smul.addr %s207, 7
      %s209 = smul.addr %s205, 7
      %s210 = sadd.s32 %s208, %s209
      %s211 = smul.addr %s210, 4
      %s212 = scalar_lea.vmem %s3, %s211
      %v214 = vld [vmem:[%s198] sm:$0xff]
      %v215 = vld [vmem:[%s198 + $0x8] sm:$0xff]
      %v216 = vld [vmem:[%s198 + $0x10] sm:$0xff]
      %v217 = vld [vmem:[%s198 + $0x18] sm:$0xff]
      %v218 = vld [vmem:[%s198 + $0x20] sm:$0xff]
      %v219 = vld [vmem:[%s198 + $0x28] sm:$0xff]
      %v220 = vld [vmem:[%s198 + $0x30] sm:$0xff]
      %v221 = vld [vmem:[%s198 + $0x38] sm:$0xff]
      %v222 = vld [vmem:[%s198 + $0x40] sm:$0xff]
      %v223 = vld [vmem:[%s198 + $0x48] sm:$0xff]
      %v232 = vunpack.c.l.b16 %v214
      %v233 = vunpack.c.h.b16 %v214
      %v234 = vunpack.c.l.b16 %v215
      %v235 = vunpack.c.h.b16 %v215
      %v236 = vunpack.c.l.b16 %v216
      %v237 = vunpack.c.h.b16 %v216
      %v238 = vunpack.c.l.b16 %v217
      %v239 = vunpack.c.l.b16 %v219
      %v240 = vunpack.c.h.b16 %v219
      %v241 = vunpack.c.l.b16 %v220
      %v242 = vunpack.c.h.b16 %v220
      %v243 = vunpack.c.l.b16 %v221
      %v244 = vunpack.c.h.b16 %v221
      %v245 = vunpack.c.l.b16 %v222
      %v246 = vpack.c.b16 %v239, %v232
      %v247 = vpack.c.b16 %v240, %v233
      %v248 = vpack.c.b16 %v241, %v234
      %v249 = vpack.c.b16 %v242, %v235
      %v250 = vpack.c.b16 %v243, %v236
      %v251 = vpack.c.b16 %v244, %v237
      %v252 = vpack.c.b16 %v245, %v238
      %v260 = vunpack.c.h.b16 %v217
      %v261 = vunpack.c.h.b16 %v222
      %v262 = vpack.c.b16 %v261, %v260
      %263 = vrot.lane.b32.xlu0 %v246, 127
      %v264 = vpop.permute.xlu0 %263
      %265 = vrot.lane.b32.xlu0 %v247, 127
      %v266 = vpop.permute.xlu0 %265
      %267 = vrot.lane.b32.xlu0 %v248, 127
      %v268 = vpop.permute.xlu0 %267
      %269 = vrot.lane.b32.xlu0 %v249, 127
      %v270 = vpop.permute.xlu0 %269
      %271 = vrot.lane.b32.xlu0 %v250, 127
      %v272 = vpop.permute.xlu0 %271
      %273 = vrot.lane.b32.xlu0 %v251, 127
      %v274 = vpop.permute.xlu0 %273
      %275 = vrot.lane.b32.xlu0 %v252, 127
      %v276 = vpop.permute.xlu0 %275
      %277 = vrot.lane.b32.xlu0 %v262, 127
      %v278 = vpop.permute.xlu0 %277
      %vm279 = vcmask 1039360
      %v280 = vsel %vm279, %v264, %v266
      %v281 = vsel %vm279, %v266, %v268
      %v282 = vsel %vm279, %v268, %v270
      %v283 = vsel %vm279, %v270, %v272
      %v284 = vsel %vm279, %v272, %v274
      %v285 = vsel %vm279, %v274, %v276
      %v286 = vsel %vm279, %v276, %v278
      %294 = vrot.lane.b32.xlu0 %v246, 126
      %v295 = vpop.permute.xlu0 %294
      %296 = vrot.lane.b32.xlu0 %v247, 126
      %v297 = vpop.permute.xlu0 %296
      %298 = vrot.lane.b32.xlu0 %v248, 126
      %v299 = vpop.permute.xlu0 %298
      %300 = vrot.lane.b32.xlu0 %v249, 126
      %v301 = vpop.permute.xlu0 %300
      %302 = vrot.lane.b32.xlu0 %v250, 126
      %v303 = vpop.permute.xlu0 %302
      %304 = vrot.lane.b32.xlu0 %v251, 126
      %v305 = vpop.permute.xlu0 %304
      %306 = vrot.lane.b32.xlu0 %v252, 126
      %v307 = vpop.permute.xlu0 %306
      %308 = vrot.lane.b32.xlu0 %v262, 126
      %v309 = vpop.permute.xlu0 %308
      %vm310 = vcmask 1031168
      %v311 = vsel %vm310, %v295, %v297
      %v312 = vsel %vm310, %v297, %v299
      %v313 = vsel %vm310, %v299, %v301
      %v314 = vsel %vm310, %v301, %v303
      %v315 = vsel %vm310, %v303, %v305
      %v316 = vsel %vm310, %v305, %v307
      %v317 = vsel %vm310, %v307, %v309
      %325 = vrot.lane.b32.xlu0 %v246, 118
      %v326 = vpop.permute.xlu0 %325
      %327 = vrot.lane.b32.xlu0 %v247, 118
      %v328 = vpop.permute.xlu0 %327
      %329 = vrot.lane.b32.xlu0 %v248, 118
      %v330 = vpop.permute.xlu0 %329
      %331 = vrot.lane.b32.xlu0 %v249, 118
      %v332 = vpop.permute.xlu0 %331
      %333 = vrot.lane.b32.xlu0 %v250, 118
      %v334 = vpop.permute.xlu0 %333
      %335 = vrot.lane.b32.xlu0 %v251, 118
      %v336 = vpop.permute.xlu0 %335
      %337 = vrot.lane.b32.xlu0 %v252, 118
      %v338 = vpop.permute.xlu0 %337
      %339 = vrot.lane.b32.xlu0 %v262, 118
      %v340 = vpop.permute.xlu0 %339
      %vm341 = vcmask 965632
      %v342 = vsel %vm341, %v326, %v328
      %v343 = vsel %vm341, %v328, %v330
      %v344 = vsel %vm341, %v330, %v332
      %v345 = vsel %vm341, %v332, %v334
      %v346 = vsel %vm341, %v334, %v336
      %v347 = vsel %vm341, %v336, %v338
      %v348 = vsel %vm341, %v338, %v340
      %356 = vrot.lane.b32.xlu0 %v246, 117
      %v357 = vpop.permute.xlu0 %356
      %358 = vrot.lane.b32.xlu0 %v247, 117
      %v359 = vpop.permute.xlu0 %358
      %360 = vrot.lane.b32.xlu0 %v248, 117
      %v361 = vpop.permute.xlu0 %360
      %362 = vrot.lane.b32.xlu0 %v249, 117
      %v363 = vpop.permute.xlu0 %362
      %364 = vrot.lane.b32.xlu0 %v250, 117
      %v365 = vpop.permute.xlu0 %364
      %366 = vrot.lane.b32.xlu0 %v251, 117
      %v367 = vpop.permute.xlu0 %366
      %368 = vrot.lane.b32.xlu0 %v252, 117
      %v369 = vpop.permute.xlu0 %368
      %370 = vrot.lane.b32.xlu0 %v262, 117
      %v371 = vpop.permute.xlu0 %370
      %vm372 = vcmask 957440
      %v373 = vsel %vm372, %v357, %v359
      %v374 = vsel %vm372, %v359, %v361
      %v375 = vsel %vm372, %v361, %v363
      %v376 = vsel %vm372, %v363, %v365
      %v377 = vsel %vm372, %v365, %v367
      %v378 = vsel %vm372, %v367, %v369
      %v379 = vsel %vm372, %v369, %v371
      %387 = vrot.lane.b32.xlu0 %v246, 116
      %v388 = vpop.permute.xlu0 %387
      %389 = vrot.lane.b32.xlu0 %v247, 116
      %v390 = vpop.permute.xlu0 %389
      %391 = vrot.lane.b32.xlu0 %v248, 116
      %v392 = vpop.permute.xlu0 %391
      %393 = vrot.lane.b32.xlu0 %v249, 116
      %v394 = vpop.permute.xlu0 %393
      %395 = vrot.lane.b32.xlu0 %v250, 116
      %v396 = vpop.permute.xlu0 %395
      %397 = vrot.lane.b32.xlu0 %v251, 116
      %v398 = vpop.permute.xlu0 %397
      %399 = vrot.lane.b32.xlu0 %v252, 116
      %v400 = vpop.permute.xlu0 %399
      %401 = vrot.lane.b32.xlu0 %v262, 116
      %v402 = vpop.permute.xlu0 %401
      %vm403 = vcmask 949248
      %v404 = vsel %vm403, %v388, %v390
      %v405 = vsel %vm403, %v390, %v392
      %v406 = vsel %vm403, %v392, %v394
      %v407 = vsel %vm403, %v394, %v396
      %v408 = vsel %vm403, %v396, %v398
      %v409 = vsel %vm403, %v398, %v400
      %v410 = vsel %vm403, %v400, %v402
      %418 = vrot.lane.b32.xlu0 %v246, 108
      %v419 = vpop.permute.xlu0 %418
      %420 = vrot.lane.b32.xlu0 %v247, 108
      %v421 = vpop.permute.xlu0 %420
      %422 = vrot.lane.b32.xlu0 %v248, 108
      %v423 = vpop.permute.xlu0 %422
      %424 = vrot.lane.b32.xlu0 %v249, 108
      %v425 = vpop.permute.xlu0 %424
      %426 = vrot.lane.b32.xlu0 %v250, 108
      %v427 = vpop.permute.xlu0 %426
      %428 = vrot.lane.b32.xlu0 %v251, 108
      %v429 = vpop.permute.xlu0 %428
      %430 = vrot.lane.b32.xlu0 %v252, 108
      %v431 = vpop.permute.xlu0 %430
      %432 = vrot.lane.b32.xlu0 %v262, 108
      %v433 = vpop.permute.xlu0 %432
      %vm434 = vcmask 883712
      %v435 = vsel %vm434, %v419, %v421
      %v436 = vsel %vm434, %v421, %v423
      %v437 = vsel %vm434, %v423, %v425
      %v438 = vsel %vm434, %v425, %v427
      %v439 = vsel %vm434, %v427, %v429
      %v440 = vsel %vm434, %v429, %v431
      %v441 = vsel %vm434, %v431, %v433
      %449 = vrot.lane.b32.xlu0 %v246, 107
      %v450 = vpop.permute.xlu0 %449
      %451 = vrot.lane.b32.xlu0 %v247, 107
      %v452 = vpop.permute.xlu0 %451
      %453 = vrot.lane.b32.xlu0 %v248, 107
      %v454 = vpop.permute.xlu0 %453
      %455 = vrot.lane.b32.xlu0 %v249, 107
      %v456 = vpop.permute.xlu0 %455
      %457 = vrot.lane.b32.xlu0 %v250, 107
      %v458 = vpop.permute.xlu0 %457
      %459 = vrot.lane.b32.xlu0 %v251, 107
      %v460 = vpop.permute.xlu0 %459
      %461 = vrot.lane.b32.xlu0 %v252, 107
      %v462 = vpop.permute.xlu0 %461
      %463 = vrot.lane.b32.xlu0 %v262, 107
      %v464 = vpop.permute.xlu0 %463
      %vm465 = vcmask 875520
      %v466 = vsel %vm465, %v450, %v452
      %v467 = vsel %vm465, %v452, %v454
      %v468 = vsel %vm465, %v454, %v456
      %v469 = vsel %vm465, %v456, %v458
      %v470 = vsel %vm465, %v458, %v460
      %v471 = vsel %vm465, %v460, %v462
      %v472 = vsel %vm465, %v462, %v464
      %480 = vrot.lane.b32.xlu0 %v246, 106
      %v481 = vpop.permute.xlu0 %480
      %482 = vrot.lane.b32.xlu0 %v247, 106
      %v483 = vpop.permute.xlu0 %482
      %484 = vrot.lane.b32.xlu0 %v248, 106
      %v485 = vpop.permute.xlu0 %484
      %486 = vrot.lane.b32.xlu0 %v249, 106
      %v487 = vpop.permute.xlu0 %486
      %488 = vrot.lane.b32.xlu0 %v250, 106
      %v489 = vpop.permute.xlu0 %488
      %490 = vrot.lane.b32.xlu0 %v251, 106
      %v491 = vpop.permute.xlu0 %490
      %492 = vrot.lane.b32.xlu0 %v252, 106
      %v493 = vpop.permute.xlu0 %492
      %494 = vrot.lane.b32.xlu0 %v262, 106
      %v495 = vpop.permute.xlu0 %494
      %vm496 = vcmask 867328
      %v497 = vsel %vm496, %v481, %v483
      %v498 = vsel %vm496, %v483, %v485
      %v499 = vsel %vm496, %v485, %v487
      %v500 = vsel %vm496, %v487, %v489
      %v501 = vsel %vm496, %v489, %v491
      %v502 = vsel %vm496, %v491, %v493
      %v503 = vsel %vm496, %v493, %v495
      %511 = vrot.lane.b32.xlu0 %v246, 28
      %v512 = vpop.permute.xlu0 %511
      %513 = vrot.lane.b32.xlu0 %v247, 28
      %v514 = vpop.permute.xlu0 %513
      %515 = vrot.lane.b32.xlu0 %v248, 28
      %v516 = vpop.permute.xlu0 %515
      %517 = vrot.lane.b32.xlu0 %v249, 28
      %v518 = vpop.permute.xlu0 %517
      %519 = vrot.lane.b32.xlu0 %v250, 28
      %v520 = vpop.permute.xlu0 %519
      %521 = vrot.lane.b32.xlu0 %v251, 28
      %v522 = vpop.permute.xlu0 %521
      %523 = vrot.lane.b32.xlu0 %v252, 28
      %v524 = vpop.permute.xlu0 %523
      %525 = vrot.lane.b32.xlu0 %v262, 28
      %v526 = vpop.permute.xlu0 %525
      %vm527 = vcmask 228352
      %v528 = vsel %vm527, %v512, %v514
      %v529 = vsel %vm527, %v514, %v516
      %v530 = vsel %vm527, %v516, %v518
      %v531 = vsel %vm527, %v518, %v520
      %v532 = vsel %vm527, %v520, %v522
      %v533 = vsel %vm527, %v522, %v524
      %v534 = vsel %vm527, %v524, %v526
      %542 = vrot.lane.b32.xlu0 %v246, 27
      %v543 = vpop.permute.xlu0 %542
      %544 = vrot.lane.b32.xlu0 %v247, 27
      %v545 = vpop.permute.xlu0 %544
      %546 = vrot.lane.b32.xlu0 %v248, 27
      %v547 = vpop.permute.xlu0 %546
      %548 = vrot.lane.b32.xlu0 %v249, 27
      %v549 = vpop.permute.xlu0 %548
      %550 = vrot.lane.b32.xlu0 %v250, 27
      %v551 = vpop.permute.xlu0 %550
      %552 = vrot.lane.b32.xlu0 %v251, 27
      %v553 = vpop.permute.xlu0 %552
      %554 = vrot.lane.b32.xlu0 %v252, 27
      %v555 = vpop.permute.xlu0 %554
      %556 = vrot.lane.b32.xlu0 %v262, 27
      %v557 = vpop.permute.xlu0 %556
      %vm558 = vcmask 220160
      %v559 = vsel %vm558, %v543, %v545
      %v560 = vsel %vm558, %v545, %v547
      %v561 = vsel %vm558, %v547, %v549
      %v562 = vsel %vm558, %v549, %v551
      %v563 = vsel %vm558, %v551, %v553
      %v564 = vsel %vm558, %v553, %v555
      %v565 = vsel %vm558, %v555, %v557
      %573 = vrot.lane.b32.xlu0 %v246, 26
      %v574 = vpop.permute.xlu0 %573
      %575 = vrot.lane.b32.xlu0 %v247, 26
      %v576 = vpop.permute.xlu0 %575
      %577 = vrot.lane.b32.xlu0 %v248, 26
      %v578 = vpop.permute.xlu0 %577
      %579 = vrot.lane.b32.xlu0 %v249, 26
      %v580 = vpop.permute.xlu0 %579
      %581 = vrot.lane.b32.xlu0 %v250, 26
      %v582 = vpop.permute.xlu0 %581
      %583 = vrot.lane.b32.xlu0 %v251, 26
      %v584 = vpop.permute.xlu0 %583
      %585 = vrot.lane.b32.xlu0 %v252, 26
      %v586 = vpop.permute.xlu0 %585
      %587 = vrot.lane.b32.xlu0 %v262, 26
      %v588 = vpop.permute.xlu0 %587
      %vm589 = vcmask 211968
      %v590 = vsel %vm589, %v574, %v576
      %v591 = vsel %vm589, %v576, %v578
      %v592 = vsel %vm589, %v578, %v580
      %v593 = vsel %vm589, %v580, %v582
      %v594 = vsel %vm589, %v582, %v584
      %v595 = vsel %vm589, %v584, %v586
      %v596 = vsel %vm589, %v586, %v588
      %604 = vrot.lane.b32.xlu0 %v246, 18
      %v605 = vpop.permute.xlu0 %604
      %606 = vrot.lane.b32.xlu0 %v247, 18
      %v607 = vpop.permute.xlu0 %606
      %608 = vrot.lane.b32.xlu0 %v248, 18
      %v609 = vpop.permute.xlu0 %608
      %610 = vrot.lane.b32.xlu0 %v249, 18
      %v611 = vpop.permute.xlu0 %610
      %612 = vrot.lane.b32.xlu0 %v250, 18
      %v613 = vpop.permute.xlu0 %612
      %614 = vrot.lane.b32.xlu0 %v251, 18
      %v615 = vpop.permute.xlu0 %614
      %616 = vrot.lane.b32.xlu0 %v252, 18
      %v617 = vpop.permute.xlu0 %616
      %618 = vrot.lane.b32.xlu0 %v262, 18
      %v619 = vpop.permute.xlu0 %618
      %vm620 = vcmask 146432
      %v621 = vsel %vm620, %v605, %v607
      %v622 = vsel %vm620, %v607, %v609
      %v623 = vsel %vm620, %v609, %v611
      %v624 = vsel %vm620, %v611, %v613
      %v625 = vsel %vm620, %v613, %v615
      %v626 = vsel %vm620, %v615, %v617
      %v627 = vsel %vm620, %v617, %v619
      %635 = vrot.lane.b32.xlu0 %v246, 17
      %v636 = vpop.permute.xlu0 %635
      %637 = vrot.lane.b32.xlu0 %v247, 17
      %v638 = vpop.permute.xlu0 %637
      %639 = vrot.lane.b32.xlu0 %v248, 17
      %v640 = vpop.permute.xlu0 %639
      %641 = vrot.lane.b32.xlu0 %v249, 17
      %v642 = vpop.permute.xlu0 %641
      %643 = vrot.lane.b32.xlu0 %v250, 17
      %v644 = vpop.permute.xlu0 %643
      %645 = vrot.lane.b32.xlu0 %v251, 17
      %v646 = vpop.permute.xlu0 %645
      %647 = vrot.lane.b32.xlu0 %v252, 17
      %v648 = vpop.permute.xlu0 %647
      %649 = vrot.lane.b32.xlu0 %v262, 17
      %v650 = vpop.permute.xlu0 %649
      %vm651 = vcmask 138240
      %v652 = vsel %vm651, %v636, %v638
      %v653 = vsel %vm651, %v638, %v640
      %v654 = vsel %vm651, %v640, %v642
      %v655 = vsel %vm651, %v642, %v644
      %v656 = vsel %vm651, %v644, %v646
      %v657 = vsel %vm651, %v646, %v648
      %v658 = vsel %vm651, %v648, %v650
      %666 = vrot.lane.b32.xlu0 %v246, 16
      %v667 = vpop.permute.xlu0 %666
      %668 = vrot.lane.b32.xlu0 %v247, 16
      %v669 = vpop.permute.xlu0 %668
      %670 = vrot.lane.b32.xlu0 %v248, 16
      %v671 = vpop.permute.xlu0 %670
      %672 = vrot.lane.b32.xlu0 %v249, 16
      %v673 = vpop.permute.xlu0 %672
      %674 = vrot.lane.b32.xlu0 %v250, 16
      %v675 = vpop.permute.xlu0 %674
      %676 = vrot.lane.b32.xlu0 %v251, 16
      %v677 = vpop.permute.xlu0 %676
      %678 = vrot.lane.b32.xlu0 %v252, 16
      %v679 = vpop.permute.xlu0 %678
      %680 = vrot.lane.b32.xlu0 %v262, 16
      %v681 = vpop.permute.xlu0 %680
      %vm682 = vcmask 130048
      %v683 = vsel %vm682, %v667, %v669
      %v684 = vsel %vm682, %v669, %v671
      %v685 = vsel %vm682, %v671, %v673
      %v686 = vsel %vm682, %v673, %v675
      %v687 = vsel %vm682, %v675, %v677
      %v688 = vsel %vm682, %v677, %v679
      %v689 = vsel %vm682, %v679, %v681
      %697 = vrot.lane.b32.xlu0 %v246, 8
      %v698 = vpop.permute.xlu0 %697
      %699 = vrot.lane.b32.xlu0 %v247, 8
      %v700 = vpop.permute.xlu0 %699
      %701 = vrot.lane.b32.xlu0 %v248, 8
      %v702 = vpop.permute.xlu0 %701
      %703 = vrot.lane.b32.xlu0 %v249, 8
      %v704 = vpop.permute.xlu0 %703
      %705 = vrot.lane.b32.xlu0 %v250, 8
      %v706 = vpop.permute.xlu0 %705
      %707 = vrot.lane.b32.xlu0 %v251, 8
      %v708 = vpop.permute.xlu0 %707
      %709 = vrot.lane.b32.xlu0 %v252, 8
      %v710 = vpop.permute.xlu0 %709
      %711 = vrot.lane.b32.xlu0 %v262, 8
      %v712 = vpop.permute.xlu0 %711
      %vm713 = vcmask 64512
      %v714 = vsel %vm713, %v698, %v700
      %v715 = vsel %vm713, %v700, %v702
      %v716 = vsel %vm713, %v702, %v704
      %v717 = vsel %vm713, %v704, %v706
      %v718 = vsel %vm713, %v706, %v708
      %v719 = vsel %vm713, %v708, %v710
      %v720 = vsel %vm713, %v710, %v712
      %v730 = vunpack.c.l.b16 %v218
      %v731 = vunpack.c.l.b16 %v223
      %v732 = vpack.c.b16 %v731, %v730
      %733 = vrot.lane.b32.xlu0 %v247, 49
      %v734 = vpop.permute.xlu0 %733
      %735 = vrot.lane.b32.xlu0 %v248, 49
      %v736 = vpop.permute.xlu0 %735
      %737 = vrot.lane.b32.xlu0 %v249, 49
      %v738 = vpop.permute.xlu0 %737
      %739 = vrot.lane.b32.xlu0 %v250, 49
      %v740 = vpop.permute.xlu0 %739
      %741 = vrot.lane.b32.xlu0 %v251, 49
      %v742 = vpop.permute.xlu0 %741
      %743 = vrot.lane.b32.xlu0 %v252, 49
      %v744 = vpop.permute.xlu0 %743
      %745 = vrot.lane.b32.xlu0 %v262, 49
      %v746 = vpop.permute.xlu0 %745
      %747 = vrot.lane.b32.xlu0 %v732, 49
      %v748 = vpop.permute.xlu0 %747
      %vm749 = vcmask 400384
      %v750 = vsel %vm749, %v734, %v736
      %v751 = vsel %vm749, %v736, %v738
      %v752 = vsel %vm749, %v738, %v740
      %v753 = vsel %vm749, %v740, %v742
      %v754 = vsel %vm749, %v742, %v744
      %v755 = vsel %vm749, %v744, %v746
      %v756 = vsel %vm749, %v746, %v748
      %757 = vrot.lane.b32.xlu0 %v247, 48
      %v758 = vpop.permute.xlu0 %757
      %759 = vrot.lane.b32.xlu0 %v248, 48
      %v760 = vpop.permute.xlu0 %759
      %761 = vrot.lane.b32.xlu0 %v249, 48
      %v762 = vpop.permute.xlu0 %761
      %763 = vrot.lane.b32.xlu0 %v250, 48
      %v764 = vpop.permute.xlu0 %763
      %765 = vrot.lane.b32.xlu0 %v251, 48
      %v766 = vpop.permute.xlu0 %765
      %767 = vrot.lane.b32.xlu0 %v252, 48
      %v768 = vpop.permute.xlu0 %767
      %769 = vrot.lane.b32.xlu0 %v262, 48
      %v770 = vpop.permute.xlu0 %769
      %771 = vrot.lane.b32.xlu0 %v732, 48
      %v772 = vpop.permute.xlu0 %771
      %vm773 = vcmask 392192
      %v774 = vsel %vm773, %v758, %v760
      %v775 = vsel %vm773, %v760, %v762
      %v776 = vsel %vm773, %v762, %v764
      %v777 = vsel %vm773, %v764, %v766
      %v778 = vsel %vm773, %v766, %v768
      %v779 = vsel %vm773, %v768, %v770
      %v780 = vsel %vm773, %v770, %v772
      %781 = vrot.lane.b32.xlu0 %v247, 47
      %v782 = vpop.permute.xlu0 %781
      %783 = vrot.lane.b32.xlu0 %v248, 47
      %v784 = vpop.permute.xlu0 %783
      %785 = vrot.lane.b32.xlu0 %v249, 47
      %v786 = vpop.permute.xlu0 %785
      %787 = vrot.lane.b32.xlu0 %v250, 47
      %v788 = vpop.permute.xlu0 %787
      %789 = vrot.lane.b32.xlu0 %v251, 47
      %v790 = vpop.permute.xlu0 %789
      %791 = vrot.lane.b32.xlu0 %v252, 47
      %v792 = vpop.permute.xlu0 %791
      %793 = vrot.lane.b32.xlu0 %v262, 47
      %v794 = vpop.permute.xlu0 %793
      %795 = vrot.lane.b32.xlu0 %v732, 47
      %v796 = vpop.permute.xlu0 %795
      %vm797 = vcmask 384000
      %v798 = vsel %vm797, %v782, %v784
      %v799 = vsel %vm797, %v784, %v786
      %v800 = vsel %vm797, %v786, %v788
      %v801 = vsel %vm797, %v788, %v790
      %v802 = vsel %vm797, %v790, %v792
      %v803 = vsel %vm797, %v792, %v794
      %v804 = vsel %vm797, %v794, %v796
      %805 = vrot.lane.b32.xlu0 %v247, 39
      %v806 = vpop.permute.xlu0 %805
      %807 = vrot.lane.b32.xlu0 %v248, 39
      %v808 = vpop.permute.xlu0 %807
      %809 = vrot.lane.b32.xlu0 %v249, 39
      %v810 = vpop.permute.xlu0 %809
      %811 = vrot.lane.b32.xlu0 %v250, 39
      %v812 = vpop.permute.xlu0 %811
      %813 = vrot.lane.b32.xlu0 %v251, 39
      %v814 = vpop.permute.xlu0 %813
      %815 = vrot.lane.b32.xlu0 %v252, 39
      %v816 = vpop.permute.xlu0 %815
      %817 = vrot.lane.b32.xlu0 %v262, 39
      %v818 = vpop.permute.xlu0 %817
      %819 = vrot.lane.b32.xlu0 %v732, 39
      %v820 = vpop.permute.xlu0 %819
      %vm821 = vcmask 318464
      %v822 = vsel %vm821, %v806, %v808
      %v823 = vsel %vm821, %v808, %v810
      %v824 = vsel %vm821, %v810, %v812
      %v825 = vsel %vm821, %v812, %v814
      %v826 = vsel %vm821, %v814, %v816
      %v827 = vsel %vm821, %v816, %v818
      %v828 = vsel %vm821, %v818, %v820
      %829 = vrot.lane.b32.xlu0 %v247, 38
      %v830 = vpop.permute.xlu0 %829
      %831 = vrot.lane.b32.xlu0 %v248, 38
      %v832 = vpop.permute.xlu0 %831
      %833 = vrot.lane.b32.xlu0 %v249, 38
      %v834 = vpop.permute.xlu0 %833
      %835 = vrot.lane.b32.xlu0 %v250, 38
      %v836 = vpop.permute.xlu0 %835
      %837 = vrot.lane.b32.xlu0 %v251, 38
      %v838 = vpop.permute.xlu0 %837
      %839 = vrot.lane.b32.xlu0 %v252, 38
      %v840 = vpop.permute.xlu0 %839
      %841 = vrot.lane.b32.xlu0 %v262, 38
      %v842 = vpop.permute.xlu0 %841
      %843 = vrot.lane.b32.xlu0 %v732, 38
      %v844 = vpop.permute.xlu0 %843
      %vm845 = vcmask 310272
      %v846 = vsel %vm845, %v830, %v832
      %v847 = vsel %vm845, %v832, %v834
      %v848 = vsel %vm845, %v834, %v836
      %v849 = vsel %vm845, %v836, %v838
      %v850 = vsel %vm845, %v838, %v840
      %v851 = vsel %vm845, %v840, %v842
      %v852 = vsel %vm845, %v842, %v844
      %853 = vrot.lane.b32.xlu0 %v247, 37
      %v854 = vpop.permute.xlu0 %853
      %855 = vrot.lane.b32.xlu0 %v248, 37
      %v856 = vpop.permute.xlu0 %855
      %857 = vrot.lane.b32.xlu0 %v249, 37
      %v858 = vpop.permute.xlu0 %857
      %859 = vrot.lane.b32.xlu0 %v250, 37
      %v860 = vpop.permute.xlu0 %859
      %861 = vrot.lane.b32.xlu0 %v251, 37
      %v862 = vpop.permute.xlu0 %861
      %863 = vrot.lane.b32.xlu0 %v252, 37
      %v864 = vpop.permute.xlu0 %863
      %865 = vrot.lane.b32.xlu0 %v262, 37
      %v866 = vpop.permute.xlu0 %865
      %867 = vrot.lane.b32.xlu0 %v732, 37
      %v868 = vpop.permute.xlu0 %867
      %vm869 = vcmask 302080
      %v870 = vsel %vm869, %v854, %v856
      %v871 = vsel %vm869, %v856, %v858
      %v872 = vsel %vm869, %v858, %v860
      %v873 = vsel %vm869, %v860, %v862
      %v874 = vsel %vm869, %v862, %v864
      %v875 = vsel %vm869, %v864, %v866
      %v876 = vsel %vm869, %v866, %v868
      %877 = vrot.lane.b32.xlu0 %v247, 29
      %v878 = vpop.permute.xlu0 %877
      %879 = vrot.lane.b32.xlu0 %v248, 29
      %v880 = vpop.permute.xlu0 %879
      %881 = vrot.lane.b32.xlu0 %v249, 29
      %v882 = vpop.permute.xlu0 %881
      %883 = vrot.lane.b32.xlu0 %v250, 29
      %v884 = vpop.permute.xlu0 %883
      %885 = vrot.lane.b32.xlu0 %v251, 29
      %v886 = vpop.permute.xlu0 %885
      %887 = vrot.lane.b32.xlu0 %v252, 29
      %v888 = vpop.permute.xlu0 %887
      %889 = vrot.lane.b32.xlu0 %v262, 29
      %v890 = vpop.permute.xlu0 %889
      %891 = vrot.lane.b32.xlu0 %v732, 29
      %v892 = vpop.permute.xlu0 %891
      %vm893 = vcmask 236544
      %v894 = vsel %vm893, %v878, %v880
      %v895 = vsel %vm893, %v880, %v882
      %v896 = vsel %vm893, %v882, %v884
      %v897 = vsel %vm893, %v884, %v886
      %v898 = vsel %vm893, %v886, %v888
      %v899 = vsel %vm893, %v888, %v890
      %v900 = vsel %vm893, %v890, %v892
      %901 = vrot.lane.b32.xlu0 %v732, 28
      %v902 = vpop.permute.xlu0 %901
      %v903 = vsel %vm527, %v526, %v902
      %904 = vrot.lane.b32.xlu0 %v732, 27
      %v905 = vpop.permute.xlu0 %904
      %v906 = vsel %vm558, %v557, %v905
      %907 = vrot.lane.b32.xlu0 %v246, 7
      %v908 = vpop.permute.xlu0 %907
      %909 = vrot.lane.b32.xlu0 %v247, 7
      %v910 = vpop.permute.xlu0 %909
      %911 = vrot.lane.b32.xlu0 %v248, 7
      %v912 = vpop.permute.xlu0 %911
      %913 = vrot.lane.b32.xlu0 %v249, 7
      %v914 = vpop.permute.xlu0 %913
      %915 = vrot.lane.b32.xlu0 %v250, 7
      %v916 = vpop.permute.xlu0 %915
      %917 = vrot.lane.b32.xlu0 %v251, 7
      %v918 = vpop.permute.xlu0 %917
      %919 = vrot.lane.b32.xlu0 %v252, 7
      %v920 = vpop.permute.xlu0 %919
      %921 = vrot.lane.b32.xlu0 %v262, 7
      %v922 = vpop.permute.xlu0 %921
      %923 = vrot.lane.b32.xlu0 %v280, 7
      %v924 = vpop.permute.xlu0 %923
      %925 = vrot.lane.b32.xlu0 %v281, 7
      %v926 = vpop.permute.xlu0 %925
      %927 = vrot.lane.b32.xlu0 %v282, 7
      %v928 = vpop.permute.xlu0 %927
      %929 = vrot.lane.b32.xlu0 %v283, 7
      %v930 = vpop.permute.xlu0 %929
      %931 = vrot.lane.b32.xlu0 %v284, 7
      %v932 = vpop.permute.xlu0 %931
      %933 = vrot.lane.b32.xlu0 %v285, 7
      %v934 = vpop.permute.xlu0 %933
      %935 = vrot.lane.b32.xlu0 %v286, 7
      %v936 = vpop.permute.xlu0 %935
      %937 = vrot.lane.b32.xlu0 %v278, 7
      %v938 = vpop.permute.xlu0 %937
      %939 = vrot.lane.b32.xlu0 %v734, 7
      %v940 = vpop.permute.xlu0 %939
      %941 = vrot.lane.b32.xlu0 %v750, 7
      %v942 = vpop.permute.xlu0 %941
      %943 = vrot.lane.b32.xlu0 %v751, 7
      %v944 = vpop.permute.xlu0 %943
      %945 = vrot.lane.b32.xlu0 %v752, 7
      %v946 = vpop.permute.xlu0 %945
      %947 = vrot.lane.b32.xlu0 %v753, 7
      %v948 = vpop.permute.xlu0 %947
      %949 = vrot.lane.b32.xlu0 %v754, 7
      %v950 = vpop.permute.xlu0 %949
      %951 = vrot.lane.b32.xlu0 %v755, 7
      %v952 = vpop.permute.xlu0 %951
      %953 = vrot.lane.b32.xlu0 %v756, 7
      %v954 = vpop.permute.xlu0 %953
      %955 = vrot.lane.b32.xlu0 %v758, 7
      %v956 = vpop.permute.xlu0 %955
      %957 = vrot.lane.b32.xlu0 %v774, 7
      %v958 = vpop.permute.xlu0 %957
      %959 = vrot.lane.b32.xlu0 %v775, 7
      %v960 = vpop.permute.xlu0 %959
      %961 = vrot.lane.b32.xlu0 %v776, 7
      %v962 = vpop.permute.xlu0 %961
      %963 = vrot.lane.b32.xlu0 %v777, 7
      %v964 = vpop.permute.xlu0 %963
      %965 = vrot.lane.b32.xlu0 %v778, 7
      %v966 = vpop.permute.xlu0 %965
      %967 = vrot.lane.b32.xlu0 %v779, 7
      %v968 = vpop.permute.xlu0 %967
      %969 = vrot.lane.b32.xlu0 %v780, 7
      %v970 = vpop.permute.xlu0 %969
      %971 = vrot.lane.b32.xlu0 %v782, 7
      %v972 = vpop.permute.xlu0 %971
      %973 = vrot.lane.b32.xlu0 %v798, 7
      %v974 = vpop.permute.xlu0 %973
      %975 = vrot.lane.b32.xlu0 %v799, 7
      %v976 = vpop.permute.xlu0 %975
      %977 = vrot.lane.b32.xlu0 %v800, 7
      %v978 = vpop.permute.xlu0 %977
      %979 = vrot.lane.b32.xlu0 %v801, 7
      %v980 = vpop.permute.xlu0 %979
      %981 = vrot.lane.b32.xlu0 %v802, 7
      %v982 = vpop.permute.xlu0 %981
      %983 = vrot.lane.b32.xlu0 %v803, 7
      %v984 = vpop.permute.xlu0 %983
      %985 = vrot.lane.b32.xlu0 %v804, 7
      %v986 = vpop.permute.xlu0 %985
      %987 = vrot.lane.b32.xlu0 %v806, 7
      %v988 = vpop.permute.xlu0 %987
      %989 = vrot.lane.b32.xlu0 %v822, 7
      %v990 = vpop.permute.xlu0 %989
      %991 = vrot.lane.b32.xlu0 %v823, 7
      %v992 = vpop.permute.xlu0 %991
      %993 = vrot.lane.b32.xlu0 %v824, 7
      %v994 = vpop.permute.xlu0 %993
      %995 = vrot.lane.b32.xlu0 %v825, 7
      %v996 = vpop.permute.xlu0 %995
      %997 = vrot.lane.b32.xlu0 %v826, 7
      %v998 = vpop.permute.xlu0 %997
      %999 = vrot.lane.b32.xlu0 %v827, 7
      %v1000 = vpop.permute.xlu0 %999
      %1001 = vrot.lane.b32.xlu0 %v828, 7
      %v1002 = vpop.permute.xlu0 %1001
      %1003 = vrot.lane.b32.xlu0 %v830, 7
      %v1004 = vpop.permute.xlu0 %1003
      %1005 = vrot.lane.b32.xlu0 %v846, 7
      %v1006 = vpop.permute.xlu0 %1005
      %1007 = vrot.lane.b32.xlu0 %v847, 7
      %v1008 = vpop.permute.xlu0 %1007
      %1009 = vrot.lane.b32.xlu0 %v848, 7
      %v1010 = vpop.permute.xlu0 %1009
      %1011 = vrot.lane.b32.xlu0 %v849, 7
      %v1012 = vpop.permute.xlu0 %1011
      %1013 = vrot.lane.b32.xlu0 %v850, 7
      %v1014 = vpop.permute.xlu0 %1013
      %1015 = vrot.lane.b32.xlu0 %v851, 7
      %v1016 = vpop.permute.xlu0 %1015
      %1017 = vrot.lane.b32.xlu0 %v852, 7
      %v1018 = vpop.permute.xlu0 %1017
      %1019 = vrot.lane.b32.xlu0 %v854, 7
      %v1020 = vpop.permute.xlu0 %1019
      %1021 = vrot.lane.b32.xlu0 %v870, 7
      %v1022 = vpop.permute.xlu0 %1021
      %1023 = vrot.lane.b32.xlu0 %v871, 7
      %v1024 = vpop.permute.xlu0 %1023
      %1025 = vrot.lane.b32.xlu0 %v872, 7
      %v1026 = vpop.permute.xlu0 %1025
      %1027 = vrot.lane.b32.xlu0 %v873, 7
      %v1028 = vpop.permute.xlu0 %1027
      %1029 = vrot.lane.b32.xlu0 %v874, 7
      %v1030 = vpop.permute.xlu0 %1029
      %1031 = vrot.lane.b32.xlu0 %v875, 7
      %v1032 = vpop.permute.xlu0 %1031
      %1033 = vrot.lane.b32.xlu0 %v876, 7
      %v1034 = vpop.permute.xlu0 %1033
      %1035 = vrot.lane.b32.xlu0 %v878, 7
      %v1036 = vpop.permute.xlu0 %1035
      %1037 = vrot.lane.b32.xlu0 %v894, 7
      %v1038 = vpop.permute.xlu0 %1037
      %1039 = vrot.lane.b32.xlu0 %v895, 7
      %v1040 = vpop.permute.xlu0 %1039
      %1041 = vrot.lane.b32.xlu0 %v896, 7
      %v1042 = vpop.permute.xlu0 %1041
      %1043 = vrot.lane.b32.xlu0 %v897, 7
      %v1044 = vpop.permute.xlu0 %1043
      %1045 = vrot.lane.b32.xlu0 %v898, 7
      %v1046 = vpop.permute.xlu0 %1045
      %1047 = vrot.lane.b32.xlu0 %v899, 7
      %v1048 = vpop.permute.xlu0 %1047
      %1049 = vrot.lane.b32.xlu0 %v900, 7
      %v1050 = vpop.permute.xlu0 %1049
      %1051 = vrot.lane.b32.xlu0 %v514, 7
      %v1052 = vpop.permute.xlu0 %1051
      %1053 = vrot.lane.b32.xlu0 %v529, 7
      %v1054 = vpop.permute.xlu0 %1053
      %1055 = vrot.lane.b32.xlu0 %v530, 7
      %v1056 = vpop.permute.xlu0 %1055
      %1057 = vrot.lane.b32.xlu0 %v531, 7
      %v1058 = vpop.permute.xlu0 %1057
      %1059 = vrot.lane.b32.xlu0 %v532, 7
      %v1060 = vpop.permute.xlu0 %1059
      %1061 = vrot.lane.b32.xlu0 %v533, 7
      %v1062 = vpop.permute.xlu0 %1061
      %1063 = vrot.lane.b32.xlu0 %v534, 7
      %v1064 = vpop.permute.xlu0 %1063
      %1065 = vrot.lane.b32.xlu0 %v903, 7
      %v1066 = vpop.permute.xlu0 %1065
      %1067 = vrot.lane.b32.xlu0 %v545, 7
      %v1068 = vpop.permute.xlu0 %1067
      %1069 = vrot.lane.b32.xlu0 %v560, 7
      %v1070 = vpop.permute.xlu0 %1069
      %1071 = vrot.lane.b32.xlu0 %v561, 7
      %v1072 = vpop.permute.xlu0 %1071
      %1073 = vrot.lane.b32.xlu0 %v562, 7
      %v1074 = vpop.permute.xlu0 %1073
      %1075 = vrot.lane.b32.xlu0 %v563, 7
      %v1076 = vpop.permute.xlu0 %1075
      %1077 = vrot.lane.b32.xlu0 %v564, 7
      %v1078 = vpop.permute.xlu0 %1077
      %1079 = vrot.lane.b32.xlu0 %v565, 7
      %v1080 = vpop.permute.xlu0 %1079
      %1081 = vrot.lane.b32.xlu0 %v906, 7
      %v1082 = vpop.permute.xlu0 %1081
      %vm1083 = vcmask 56320
      %v1084 = vsel %vm1083, %v908, %v910
      %v1085 = vsel %vm1083, %v910, %v912
      %v1086 = vsel %vm1083, %v912, %v914
      %v1087 = vsel %vm1083, %v914, %v916
      %v1088 = vsel %vm1083, %v916, %v918
      %v1089 = vsel %vm1083, %v918, %v920
      %v1090 = vsel %vm1083, %v920, %v922
      %v1091 = vsel %vm1083, %v924, %v926
      %v1092 = vsel %vm1083, %v926, %v928
      %v1093 = vsel %vm1083, %v928, %v930
      %v1094 = vsel %vm1083, %v930, %v932
      %v1095 = vsel %vm1083, %v932, %v934
      %v1096 = vsel %vm1083, %v934, %v936
      %v1097 = vsel %vm1083, %v936, %v938
      %v1098 = vsel %vm1083, %v940, %v942
      %v1099 = vsel %vm1083, %v942, %v944
      %v1100 = vsel %vm1083, %v944, %v946
      %v1101 = vsel %vm1083, %v946, %v948
      %v1102 = vsel %vm1083, %v948, %v950
      %v1103 = vsel %vm1083, %v950, %v952
      %v1104 = vsel %vm1083, %v952, %v954
      %v1105 = vsel %vm1083, %v956, %v958
      %v1106 = vsel %vm1083, %v958, %v960
      %v1107 = vsel %vm1083, %v960, %v962
      %v1108 = vsel %vm1083, %v962, %v964
      %v1109 = vsel %vm1083, %v964, %v966
      %v1110 = vsel %vm1083, %v966, %v968
      %v1111 = vsel %vm1083, %v968, %v970
      %v1112 = vsel %vm1083, %v972, %v974
      %v1113 = vsel %vm1083, %v974, %v976
      %v1114 = vsel %vm1083, %v976, %v978
      %v1115 = vsel %vm1083, %v978, %v980
      %v1116 = vsel %vm1083, %v980, %v982
      %v1117 = vsel %vm1083, %v982, %v984
      %v1118 = vsel %vm1083, %v984, %v986
      %v1119 = vsel %vm1083, %v988, %v990
      %v1120 = vsel %vm1083, %v990, %v992
      %v1121 = vsel %vm1083, %v992, %v994
      %v1122 = vsel %vm1083, %v994, %v996
      %v1123 = vsel %vm1083, %v996, %v998
      %v1124 = vsel %vm1083, %v998, %v1000
      %v1125 = vsel %vm1083, %v1000, %v1002
      %v1126 = vsel %vm1083, %v1004, %v1006
      %v1127 = vsel %vm1083, %v1006, %v1008
      %v1128 = vsel %vm1083, %v1008, %v1010
      %v1129 = vsel %vm1083, %v1010, %v1012
      %v1130 = vsel %vm1083, %v1012, %v1014
      %v1131 = vsel %vm1083, %v1014, %v1016
      %v1132 = vsel %vm1083, %v1016, %v1018
      %v1133 = vsel %vm1083, %v1020, %v1022
      %v1134 = vsel %vm1083, %v1022, %v1024
      %v1135 = vsel %vm1083, %v1024, %v1026
      %v1136 = vsel %vm1083, %v1026, %v1028
      %v1137 = vsel %vm1083, %v1028, %v1030
      %v1138 = vsel %vm1083, %v1030, %v1032
      %v1139 = vsel %vm1083, %v1032, %v1034
      %v1140 = vsel %vm1083, %v1036, %v1038
      %v1141 = vsel %vm1083, %v1038, %v1040
      %v1142 = vsel %vm1083, %v1040, %v1042
      %v1143 = vsel %vm1083, %v1042, %v1044
      %v1144 = vsel %vm1083, %v1044, %v1046
      %v1145 = vsel %vm1083, %v1046, %v1048
      %v1146 = vsel %vm1083, %v1048, %v1050
      %v1147 = vsel %vm1083, %v1052, %v1054
      %v1148 = vsel %vm1083, %v1054, %v1056
      %v1149 = vsel %vm1083, %v1056, %v1058
      %v1150 = vsel %vm1083, %v1058, %v1060
      %v1151 = vsel %vm1083, %v1060, %v1062
      %v1152 = vsel %vm1083, %v1062, %v1064
      %v1153 = vsel %vm1083, %v1064, %v1066
      %v1154 = vsel %vm1083, %v1068, %v1070
      %v1155 = vsel %vm1083, %v1070, %v1072
      %v1156 = vsel %vm1083, %v1072, %v1074
      %v1157 = vsel %vm1083, %v1074, %v1076
      %v1158 = vsel %vm1083, %v1076, %v1078
      %v1159 = vsel %vm1083, %v1078, %v1080
      %v1160 = vsel %vm1083, %v1080, %v1082
      %v1238 = vld [vmem:[%s203] sm:$0xff]
      %v1239 = vld [vmem:[%s203 + $0x8] sm:$0xff]
      %v1242 = vunpack.c.l.b16 %v1238
      %v1243 = vunpack.c.h.b16 %v1238
      %v1244 = vunpack.c.l.b16 %v1239
      %v1245 = vunpack.c.h.b16 %v1239
      %v1246 = vpack.c.b16 %v1242, %v1242
      %v1247 = vpack.c.b16 %v1243, %v1243
      %v1248 = vpack.c.b16 %v1244, %v1244
      %v1249 = vpack.c.b16 %v1245, %v1245
      %vm1253 = vcmask 392192
      %v1255 = vsel %vm1253, %v1249, 0
      %1257 = vmatprep.subr.bf16.mxu0 %v247
      %1258 = vmatpush1.bf16.msra.mxu0 %v246
      %1259 = vmatprep.subr.bf16.mxu0 %v281
      %1260 = vmatpush1.bf16.msra.mxu0 %v280
      %1261 = vmatprep.subr.bf16.mxu0 %v312
      %1262 = vmatpush1.bf16.msra.mxu0 %v311
      %1263 = vmatprep.subr.bf16.mxu0 %v343
      %1264 = vmatpush1.bf16.msra.mxu0 %v342
      %1265 = vmatprep.subr.bf16.mxu0 %v374
      %1266 = vmatpush1.bf16.msra.mxu0 %v373
      %1267 = vmatprep.subr.bf16.mxu0 %v405
      %1268 = vmatpush1.bf16.msra.mxu0 %v404
      %1269 = vmatprep.subr.bf16.mxu0 %v436
      %1270 = vmatpush1.bf16.msra.mxu0 %v435
      %1271 = vmatprep.subr.bf16.mxu0 %v467
      %1272 = vmatpush1.bf16.msra.mxu0 %v466
      %1273 = vmatprep.subr.bf16.mxu0 %v498
      %1274 = vmatpush1.bf16.msra.mxu0 %v497
      %1275 = vmatprep.subr.bf16.mxu0 %v529
      %1276 = vmatpush1.bf16.msra.mxu0 %v528
      %1277 = vmatprep.subr.bf16.mxu0 %v560
      %1278 = vmatpush1.bf16.msra.mxu0 %v559
      %1279 = vmatprep.subr.bf16.mxu0 %v591
      %1280 = vmatpush1.bf16.msra.mxu0 %v590
      %1281 = vmatprep.subr.bf16.mxu0 %v622
      %1282 = vmatpush1.bf16.msra.mxu0 %v621
      %1283 = vmatprep.subr.bf16.mxu0 %v653
      %1284 = vmatpush1.bf16.msra.mxu0 %v652
      %1285 = vmatprep.subr.bf16.mxu0 %v684
      %1286 = vmatpush1.bf16.msra.mxu0 %v683
      %1287 = vmatprep.subr.bf16.mxu0 %v715
      %1288 = vmatpush1.bf16.msra.mxu0 %v714
      %1289 = vmatprep.mubr.bf16.mxu0 %v1247
      %1290 = vmatmul.mubr.bf16.gmra.mrb[0].mxu0 %v1246
      %v1291 = vpop.f32.mrb[0].mxu0
      %v1292 = vadd.f32 0.0, %v1291
      %v1293 = vpop.f32.mrb[0].mxu0
      %v1294 = vadd.f32 0.0, %v1293
      %v1295 = vpop.f32.mrb[0].mxu0
      %v1296 = vpop.f32.mrb[0].mxu0
      %1297 = vdwg.mxu0
      %1298 = vmatprep.subr.bf16.mxu0 %v1085
      %1299 = vmatpush1.bf16.msra.mxu0 %v1084
      %1300 = vmatprep.subr.bf16.mxu0 %v1092
      %1301 = vmatpush1.bf16.msra.mxu0 %v1091
      %1302 = vmatprep.subr.bf16.mxu0 %v1099
      %1303 = vmatpush1.bf16.msra.mxu0 %v1098
      %1304 = vmatprep.subr.bf16.mxu0 %v1106
      %1305 = vmatpush1.bf16.msra.mxu0 %v1105
      %1306 = vmatprep.subr.bf16.mxu0 %v1113
      %1307 = vmatpush1.bf16.msra.mxu0 %v1112
      %1308 = vmatprep.subr.bf16.mxu0 %v1120
      %1309 = vmatpush1.bf16.msra.mxu0 %v1119
      %1310 = vmatprep.subr.bf16.mxu0 %v1127
      %1311 = vmatpush1.bf16.msra.mxu0 %v1126
      %1312 = vmatprep.subr.bf16.mxu0 %v1134
      %1313 = vmatpush1.bf16.msra.mxu0 %v1133
      %1314 = vmatprep.subr.bf16.mxu0 %v1141
      %1315 = vmatpush1.bf16.msra.mxu0 %v1140
      %1316 = vmatprep.subr.bf16.mxu0 %v1148
      %1317 = vmatpush1.bf16.msra.mxu0 %v1147
      %1318 = vmatprep.subr.bf16.mxu0 %v1155
      %1319 = vmatpush1.bf16.msra.mxu0 %v1154
      %1320 = vmatprep.subr.bf16.mxu0 0
      %1321 = vmatpush1.bf16.msra.mxu0 0
      %1322 = vmatprep.subr.bf16.mxu0 0
      %1323 = vmatpush1.bf16.msra.mxu0 0
      %1324 = vmatprep.subr.bf16.mxu0 0
      %1325 = vmatpush1.bf16.msra.mxu0 0
      %1326 = vmatprep.subr.bf16.mxu0 0
      %1327 = vmatpush1.bf16.msra.mxu0 0
      %1328 = vmatprep.subr.bf16.mxu0 0
      %1329 = vmatpush1.bf16.msra.mxu0 0
      %1330 = vmatprep.mubr.bf16.mxu0 %v1255
      %1331 = vmatmul.mubr.bf16.gmra.mrb[0].mxu0 %v1248
      %v1332 = vpop.f32.mrb[0].mxu0
      %v1333 = vadd.f32 %v1292, %v1332
      %v1334 = vpop.f32.mrb[0].mxu0
      %v1335 = vadd.f32 %v1294, %v1334
      %v1336 = vpop.f32.mrb[0].mxu0
      %v1337 = vpop.f32.mrb[0].mxu0
      %1338 = vdwg.mxu0
      %1339 = vmatprep.subr.bf16.mxu0 %v249
      %1340 = vmatpush1.bf16.msra.mxu0 %v248
      %1341 = vmatprep.subr.bf16.mxu0 %v283
      %1342 = vmatpush1.bf16.msra.mxu0 %v282
      %1343 = vmatprep.subr.bf16.mxu0 %v314
      %1344 = vmatpush1.bf16.msra.mxu0 %v313
      %1345 = vmatprep.subr.bf16.mxu0 %v345
      %1346 = vmatpush1.bf16.msra.mxu0 %v344
      %1347 = vmatprep.subr.bf16.mxu0 %v376
      %1348 = vmatpush1.bf16.msra.mxu0 %v375
      %1349 = vmatprep.subr.bf16.mxu0 %v407
      %1350 = vmatpush1.bf16.msra.mxu0 %v406
      %1351 = vmatprep.subr.bf16.mxu0 %v438
      %1352 = vmatpush1.bf16.msra.mxu0 %v437
      %1353 = vmatprep.subr.bf16.mxu0 %v469
      %1354 = vmatpush1.bf16.msra.mxu0 %v468
      %1355 = vmatprep.subr.bf16.mxu0 %v500
      %1356 = vmatpush1.bf16.msra.mxu0 %v499
      %1357 = vmatprep.subr.bf16.mxu0 %v531
      %1358 = vmatpush1.bf16.msra.mxu0 %v530
      %1359 = vmatprep.subr.bf16.mxu0 %v562
      %1360 = vmatpush1.bf16.msra.mxu0 %v561
      %1361 = vmatprep.subr.bf16.mxu0 %v593
      %1362 = vmatpush1.bf16.msra.mxu0 %v592
      %1363 = vmatprep.subr.bf16.mxu0 %v624
      %1364 = vmatpush1.bf16.msra.mxu0 %v623
      %1365 = vmatprep.subr.bf16.mxu0 %v655
      %1366 = vmatpush1.bf16.msra.mxu0 %v654
      %1367 = vmatprep.subr.bf16.mxu0 %v686
      %1368 = vmatpush1.bf16.msra.mxu0 %v685
      %1369 = vmatprep.subr.bf16.mxu0 %v717
      %1370 = vmatpush1.bf16.msra.mxu0 %v716
      %1371 = vmatprep.mubr.bf16.mxu0 %v1247
      %1372 = vmatmul.mubr.bf16.gmra.mrb[0].mxu0 %v1246
      %v1373 = vpop.f32.mrb[0].mxu0
      %v1374 = vadd.f32 0.0, %v1373
      %v1375 = vpop.f32.mrb[0].mxu0
      %v1376 = vadd.f32 0.0, %v1375
      %v1377 = vpop.f32.mrb[0].mxu0
      %v1378 = vpop.f32.mrb[0].mxu0
      %1379 = vdwg.mxu0
      %1380 = vmatprep.subr.bf16.mxu0 %v1087
      %1381 = vmatpush1.bf16.msra.mxu0 %v1086
      %1382 = vmatprep.subr.bf16.mxu0 %v1094
      %1383 = vmatpush1.bf16.msra.mxu0 %v1093
      %1384 = vmatprep.subr.bf16.mxu0 %v1101
      %1385 = vmatpush1.bf16.msra.mxu0 %v1100
      %1386 = vmatprep.subr.bf16.mxu0 %v1108
      %1387 = vmatpush1.bf16.msra.mxu0 %v1107
      %1388 = vmatprep.subr.bf16.mxu0 %v1115
      %1389 = vmatpush1.bf16.msra.mxu0 %v1114
      %1390 = vmatprep.subr.bf16.mxu0 %v1122
      %1391 = vmatpush1.bf16.msra.mxu0 %v1121
      %1392 = vmatprep.subr.bf16.mxu0 %v1129
      %1393 = vmatpush1.bf16.msra.mxu0 %v1128
      %1394 = vmatprep.subr.bf16.mxu0 %v1136
      %1395 = vmatpush1.bf16.msra.mxu0 %v1135
      %1396 = vmatprep.subr.bf16.mxu0 %v1143
      %1397 = vmatpush1.bf16.msra.mxu0 %v1142
      %1398 = vmatprep.subr.bf16.mxu0 %v1150
      %1399 = vmatpush1.bf16.msra.mxu0 %v1149
      %1400 = vmatprep.subr.bf16.mxu0 %v1157
      %1401 = vmatpush1.bf16.msra.mxu0 %v1156
      %1402 = vmatprep.subr.bf16.mxu0 0
      %1403 = vmatpush1.bf16.msra.mxu0 0
      %1404 = vmatprep.subr.bf16.mxu0 0
      %1405 = vmatpush1.bf16.msra.mxu0 0
      %1406 = vmatprep.subr.bf16.mxu0 0
      %1407 = vmatpush1.bf16.msra.mxu0 0
      %1408 = vmatprep.subr.bf16.mxu0 0
      %1409 = vmatpush1.bf16.msra.mxu0 0
      %1410 = vmatprep.subr.bf16.mxu0 0
      %1411 = vmatpush1.bf16.msra.mxu0 0
      %1412 = vmatprep.mubr.bf16.mxu0 %v1255
      %1413 = vmatmul.mubr.bf16.gmra.mrb[0].mxu0 %v1248
      %v1414 = vpop.f32.mrb[0].mxu0
      %v1415 = vadd.f32 %v1374, %v1414
      %v1416 = vpop.f32.mrb[0].mxu0
      %v1417 = vadd.f32 %v1376, %v1416
      %v1418 = vpop.f32.mrb[0].mxu0
      %v1419 = vpop.f32.mrb[0].mxu0
      %1420 = vdwg.mxu0
      %1421 = vmatprep.subr.bf16.mxu0 %v251
      %1422 = vmatpush1.bf16.msra.mxu0 %v250
      %1423 = vmatprep.subr.bf16.mxu0 %v285
      %1424 = vmatpush1.bf16.msra.mxu0 %v284
      %1425 = vmatprep.subr.bf16.mxu0 %v316
      %1426 = vmatpush1.bf16.msra.mxu0 %v315
      %1427 = vmatprep.subr.bf16.mxu0 %v347
      %1428 = vmatpush1.bf16.msra.mxu0 %v346
      %1429 = vmatprep.subr.bf16.mxu0 %v378
      %1430 = vmatpush1.bf16.msra.mxu0 %v377
      %1431 = vmatprep.subr.bf16.mxu0 %v409
      %1432 = vmatpush1.bf16.msra.mxu0 %v408
      %1433 = vmatprep.subr.bf16.mxu0 %v440
      %1434 = vmatpush1.bf16.msra.mxu0 %v439
      %1435 = vmatprep.subr.bf16.mxu0 %v471
      %1436 = vmatpush1.bf16.msra.mxu0 %v470
      %1437 = vmatprep.subr.bf16.mxu0 %v502
      %1438 = vmatpush1.bf16.msra.mxu0 %v501
      %1439 = vmatprep.subr.bf16.mxu0 %v533
      %1440 = vmatpush1.bf16.msra.mxu0 %v532
      %1441 = vmatprep.subr.bf16.mxu0 %v564
      %1442 = vmatpush1.bf16.msra.mxu0 %v563
      %1443 = vmatprep.subr.bf16.mxu0 %v595
      %1444 = vmatpush1.bf16.msra.mxu0 %v594
      %1445 = vmatprep.subr.bf16.mxu0 %v626
      %1446 = vmatpush1.bf16.msra.mxu0 %v625
      %1447 = vmatprep.subr.bf16.mxu0 %v657
      %1448 = vmatpush1.bf16.msra.mxu0 %v656
      %1449 = vmatprep.subr.bf16.mxu0 %v688
      %1450 = vmatpush1.bf16.msra.mxu0 %v687
      %1451 = vmatprep.subr.bf16.mxu0 %v719
      %1452 = vmatpush1.bf16.msra.mxu0 %v718
      %1453 = vmatprep.mubr.bf16.mxu0 %v1247
      %1454 = vmatmul.mubr.bf16.gmra.mrb[0].mxu0 %v1246
      %v1455 = vpop.f32.mrb[0].mxu0
      %v1456 = vadd.f32 0.0, %v1455
      %v1457 = vpop.f32.mrb[0].mxu0
      %v1458 = vadd.f32 0.0, %v1457
      %v1459 = vpop.f32.mrb[0].mxu0
      %v1460 = vpop.f32.mrb[0].mxu0
      %1461 = vdwg.mxu0
      %1462 = vmatprep.subr.bf16.mxu0 %v1089
      %1463 = vmatpush1.bf16.msra.mxu0 %v1088
      %1464 = vmatprep.subr.bf16.mxu0 %v1096
      %1465 = vmatpush1.bf16.msra.mxu0 %v1095
      %1466 = vmatprep.subr.bf16.mxu0 %v1103
      %1467 = vmatpush1.bf16.msra.mxu0 %v1102
      %1468 = vmatprep.subr.bf16.mxu0 %v1110
      %1469 = vmatpush1.bf16.msra.mxu0 %v1109
      %1470 = vmatprep.subr.bf16.mxu0 %v1117
      %1471 = vmatpush1.bf16.msra.mxu0 %v1116
      %1472 = vmatprep.subr.bf16.mxu0 %v1124
      %1473 = vmatpush1.bf16.msra.mxu0 %v1123
      %1474 = vmatprep.subr.bf16.mxu0 %v1131
      %1475 = vmatpush1.bf16.msra.mxu0 %v1130
      %1476 = vmatprep.subr.bf16.mxu0 %v1138
      %1477 = vmatpush1.bf16.msra.mxu0 %v1137
      %1478 = vmatprep.subr.bf16.mxu0 %v1145
      %1479 = vmatpush1.bf16.msra.mxu0 %v1144
      %1480 = vmatprep.subr.bf16.mxu0 %v1152
      %1481 = vmatpush1.bf16.msra.mxu0 %v1151
      %1482 = vmatprep.subr.bf16.mxu0 %v1159
      %1483 = vmatpush1.bf16.msra.mxu0 %v1158
      %1484 = vmatprep.subr.bf16.mxu0 0
      %1485 = vmatpush1.bf16.msra.mxu0 0
      %1486 = vmatprep.subr.bf16.mxu0 0
      %1487 = vmatpush1.bf16.msra.mxu0 0
      %1488 = vmatprep.subr.bf16.mxu0 0
      %1489 = vmatpush1.bf16.msra.mxu0 0
      %1490 = vmatprep.subr.bf16.mxu0 0
      %1491 = vmatpush1.bf16.msra.mxu0 0
      %1492 = vmatprep.subr.bf16.mxu0 0
      %1493 = vmatpush1.bf16.msra.mxu0 0
      %1494 = vmatprep.mubr.bf16.mxu0 %v1255
      %1495 = vmatmul.mubr.bf16.gmra.mrb[0].mxu0 %v1248
      %v1496 = vpop.f32.mrb[0].mxu0
      %v1497 = vadd.f32 %v1456, %v1496
      %v1498 = vpop.f32.mrb[0].mxu0
      %v1499 = vadd.f32 %v1458, %v1498
      %v1500 = vpop.f32.mrb[0].mxu0
      %v1501 = vpop.f32.mrb[0].mxu0
      %1502 = vdwg.mxu0
      %1503 = vmatprep.subr.bf16.mxu0 0
      %1504 = vmatpush1.bf16.msra.mxu0 %v252
      %1505 = vmatprep.subr.bf16.mxu0 0
      %1506 = vmatpush1.bf16.msra.mxu0 %v286
      %1507 = vmatprep.subr.bf16.mxu0 0
      %1508 = vmatpush1.bf16.msra.mxu0 %v317
      %1509 = vmatprep.subr.bf16.mxu0 0
      %1510 = vmatpush1.bf16.msra.mxu0 %v348
      %1511 = vmatprep.subr.bf16.mxu0 0
      %1512 = vmatpush1.bf16.msra.mxu0 %v379
      %1513 = vmatprep.subr.bf16.mxu0 0
      %1514 = vmatpush1.bf16.msra.mxu0 %v410
      %1515 = vmatprep.subr.bf16.mxu0 0
      %1516 = vmatpush1.bf16.msra.mxu0 %v441
      %1517 = vmatprep.subr.bf16.mxu0 0
      %1518 = vmatpush1.bf16.msra.mxu0 %v472
      %1519 = vmatprep.subr.bf16.mxu0 0
      %1520 = vmatpush1.bf16.msra.mxu0 %v503
      %1521 = vmatprep.subr.bf16.mxu0 0
      %1522 = vmatpush1.bf16.msra.mxu0 %v534
      %1523 = vmatprep.subr.bf16.mxu0 0
      %1524 = vmatpush1.bf16.msra.mxu0 %v565
      %1525 = vmatprep.subr.bf16.mxu0 0
      %1526 = vmatpush1.bf16.msra.mxu0 %v596
      %1527 = vmatprep.subr.bf16.mxu0 0
      %1528 = vmatpush1.bf16.msra.mxu0 %v627
      %1529 = vmatprep.subr.bf16.mxu0 0
      %1530 = vmatpush1.bf16.msra.mxu0 %v658
      %1531 = vmatprep.subr.bf16.mxu0 0
      %1532 = vmatpush1.bf16.msra.mxu0 %v689
      %1533 = vmatprep.subr.bf16.mxu0 0
      %1534 = vmatpush1.bf16.msra.mxu0 %v720
      %1535 = vmatprep.mubr.bf16.mxu0 %v1247
      %1536 = vmatmul.mubr.bf16.gmra.mrb[0].mxu0 %v1246
      %v1537 = vpop.f32.mrb[0].mxu0
      %v1538 = vadd.f32 0.0, %v1537
      %v1539 = vpop.f32.mrb[0].mxu0
      %v1540 = vpop.f32.mrb[0].mxu0
      %v1541 = vpop.f32.mrb[0].mxu0
      %1542 = vdwg.mxu0
      %1543 = vmatprep.subr.bf16.mxu0 0
      %1544 = vmatpush1.bf16.msra.mxu0 %v1090
      %1545 = vmatprep.subr.bf16.mxu0 0
      %1546 = vmatpush1.bf16.msra.mxu0 %v1097
      %1547 = vmatprep.subr.bf16.mxu0 0
      %1548 = vmatpush1.bf16.msra.mxu0 %v1104
      %1549 = vmatprep.subr.bf16.mxu0 0
      %1550 = vmatpush1.bf16.msra.mxu0 %v1111
      %1551 = vmatprep.subr.bf16.mxu0 0
      %1552 = vmatpush1.bf16.msra.mxu0 %v1118
      %1553 = vmatprep.subr.bf16.mxu0 0
      %1554 = vmatpush1.bf16.msra.mxu0 %v1125
      %1555 = vmatprep.subr.bf16.mxu0 0
      %1556 = vmatpush1.bf16.msra.mxu0 %v1132
      %1557 = vmatprep.subr.bf16.mxu0 0
      %1558 = vmatpush1.bf16.msra.mxu0 %v1139
      %1559 = vmatprep.subr.bf16.mxu0 0
      %1560 = vmatpush1.bf16.msra.mxu0 %v1146
      %1561 = vmatprep.subr.bf16.mxu0 0
      %1562 = vmatpush1.bf16.msra.mxu0 %v1153
      %1563 = vmatprep.subr.bf16.mxu0 0
      %1564 = vmatpush1.bf16.msra.mxu0 %v1160
      %1565 = vmatprep.subr.bf16.mxu0 0
      %1566 = vmatpush1.bf16.msra.mxu0 0
      %1567 = vmatprep.subr.bf16.mxu0 0
      %1568 = vmatpush1.bf16.msra.mxu0 0
      %1569 = vmatprep.subr.bf16.mxu0 0
      %1570 = vmatpush1.bf16.msra.mxu0 0
      %1571 = vmatprep.subr.bf16.mxu0 0
      %1572 = vmatpush1.bf16.msra.mxu0 0
      %1573 = vmatprep.subr.bf16.mxu0 0
      %1574 = vmatpush1.bf16.msra.mxu0 0
      %1575 = vmatprep.mubr.bf16.mxu0 %v1255
      %1576 = vmatmul.mubr.bf16.gmra.mrb[0].mxu0 %v1248
      %v1577 = vpop.f32.mrb[0].mxu0
      %v1578 = vadd.f32 %v1538, %v1577
      %v1579 = vpop.f32.mrb[0].mxu0
      %v1580 = vpop.f32.mrb[0].mxu0
      %v1581 = vpop.f32.mrb[0].mxu0
      %1582 = vdwg.mxu0
      %v1583 = vld [vmem:[%s2] sm:$0xff]
      %v1585 = vlaneseq
      %v1586 = vshrl.u32 %v1585, 7
      %v1587 = vsub.s32 0, %v1586
      %v1588 = vrot.slane %v1583, %v1587
      %v1589 = vlaneseq
      %v1590 = vshrl.u32 %v1589, 7
      %v1591 = vsub.s32 1, %v1590
      %v1592 = vrot.slane %v1583, %v1591
      %v1593 = vlaneseq
      %v1594 = vshrl.u32 %v1593, 7
      %v1595 = vsub.s32 2, %v1594
      %v1596 = vrot.slane %v1583, %v1595
      %v1597 = vlaneseq
      %v1598 = vshrl.u32 %v1597, 7
      %v1599 = vsub.s32 3, %v1598
      %v1600 = vrot.slane %v1583, %v1599
      %v1601 = vlaneseq
      %v1602 = vshrl.u32 %v1601, 7
      %v1603 = vsub.s32 4, %v1602
      %v1604 = vrot.slane %v1583, %v1603
      %v1605 = vlaneseq
      %v1606 = vshrl.u32 %v1605, 7
      %v1607 = vsub.s32 5, %v1606
      %v1608 = vrot.slane %v1583, %v1607
      %v1609 = vlaneseq
      %v1610 = vshrl.u32 %v1609, 7
      %v1611 = vsub.s32 6, %v1610
      %v1612 = vrot.slane %v1583, %v1611
      %v1620 = vmul.f32 %v1333, %v1588
      %v1621 = vmul.f32 %v1335, %v1592
      %v1622 = vmul.f32 %v1415, %v1596
      %v1623 = vmul.f32 %v1417, %v1600
      %v1624 = vmul.f32 %v1497, %v1604
      %v1625 = vmul.f32 %v1499, %v1608
      %v1626 = vmul.f32 %v1578, %v1612
      %v1627 = vadd.f32 %v1620, %v1621
      %v1628 = vadd.f32 %v1627, %v1622
      %v1629 = vadd.f32 %v1628, %v1623
      %v1630 = vadd.f32 %v1629, %v1624
      %v1631 = vadd.f32 %v1630, %v1625
      %v1632 = vadd.f32 %v1631, %v1626
      %1633 = vadd.xlane.f32.xlu0 %v1632
      %v1634 = vpop.xlane.xlu0 %1633
      %v1635 = vmul.f32 %v1634, 0.001953125
      %v1636 = vmul.f32 %v1620, %v1620
      %v1637 = vmul.f32 %v1621, %v1621
      %v1638 = vmul.f32 %v1622, %v1622
      %v1639 = vmul.f32 %v1623, %v1623
      %v1640 = vmul.f32 %v1624, %v1624
      %v1641 = vmul.f32 %v1625, %v1625
      %v1642 = vmul.f32 %v1626, %v1626
      %v1643 = vadd.f32 %v1636, %v1637
      %v1644 = vadd.f32 %v1643, %v1638
      %v1645 = vadd.f32 %v1644, %v1639
      %v1646 = vadd.f32 %v1645, %v1640
      %v1647 = vadd.f32 %v1646, %v1641
      %v1648 = vadd.f32 %v1647, %v1642
      %1649 = vadd.xlane.f32.xlu0 %v1648
      %v1650 = vpop.xlane.xlu0 %1649
      %v1651 = vmul.f32 %v1650, 0.001953125
      %v1652 = vmul.f32 %v1635, %v1635
      %v1653 = vsub.f32 %v1651, %v1652
      %v1654 = vsub.f32 %v1333, %v1635
      %v1655 = vsub.f32 %v1335, %v1635
      %v1656 = vsub.f32 %v1415, %v1635
      %v1657 = vsub.f32 %v1417, %v1635
      %v1658 = vsub.f32 %v1497, %v1635
      %v1659 = vsub.f32 %v1499, %v1635
      %v1660 = vsub.f32 %v1578, %v1635
      %v1661 = vadd.f32 %v1653, 1e-05
      %v1662 = vrsqrt.pop %v1661
      %v1663 = vmul.f32 %v1654, %v1662
      %v1664 = vmul.f32 %v1655, %v1662
      %v1665 = vmul.f32 %v1656, %v1662
      %v1666 = vmul.f32 %v1657, %v1662
      %v1667 = vmul.f32 %v1658, %v1662
      %v1668 = vmul.f32 %v1659, %v1662
      %v1669 = vmul.f32 %v1660, %v1662
      %vm1670 = vcmp.ge.f32.partialorder %v1663, 0.0
      %vm1671 = vcmp.ge.f32.partialorder %v1664, 0.0
      %vm1672 = vcmp.ge.f32.partialorder %v1665, 0.0
      %vm1673 = vcmp.ge.f32.partialorder %v1666, 0.0
      %vm1674 = vcmp.ge.f32.partialorder %v1667, 0.0
      %vm1675 = vcmp.ge.f32.partialorder %v1668, 0.0
      %vm1676 = vcmp.ge.f32.partialorder %v1669, 0.0
      %v1677 = vmul.f32 %v1663, 0.2
      %v1678 = vmul.f32 %v1664, 0.2
      %v1679 = vmul.f32 %v1665, 0.2
      %v1680 = vmul.f32 %v1666, 0.2
      %v1681 = vmul.f32 %v1667, 0.2
      %v1682 = vmul.f32 %v1668, 0.2
      %v1683 = vmul.f32 %v1669, 0.2
      %v1684 = vsel %vm1670, %v1663, %v1677
      %v1685 = vsel %vm1671, %v1664, %v1678
      %v1686 = vsel %vm1672, %v1665, %v1679
      %v1687 = vsel %vm1673, %v1666, %v1680
      %v1688 = vsel %vm1674, %v1667, %v1681
      %v1689 = vsel %vm1675, %v1668, %v1682
      %v1690 = vsel %vm1676, %v1669, %v1683
      %v1691 = vpack.c.bf16 %v1684, %v1684
      %v1692 = vpack.c.bf16 %v1685, %v1685
      %v1693 = vpack.c.bf16 %v1686, %v1686
      %v1694 = vpack.c.bf16 %v1687, %v1687
      %v1695 = vpack.c.bf16 %v1688, %v1688
      %v1696 = vpack.c.bf16 %v1689, %v1689
      %v1697 = vpack.c.bf16 %v1690, %v1690
      %v1705 = vunpack.c.l.b16 %v1691
      %v1706 = vunpack.c.l.b16 %v1692
      %v1707 = vunpack.c.l.b16 %v1693
      %v1708 = vunpack.c.l.b16 %v1694
      %v1709 = vunpack.c.l.b16 %v1695
      %v1710 = vunpack.c.l.b16 %v1696
      %v1711 = vunpack.c.l.b16 %v1697
      %v1712 = vpack.c.b16 %v1706, %v1705
      %v1713 = vpack.c.b16 %v1708, %v1707
      %v1714 = vpack.c.b16 %v1710, %v1709
      %v1715 = vpack.c.b16 %v1711, %v1711
      %1720 = vst [vmem:[%s212] sm:$0xff] %v1712
      %1721 = vst [vmem:[%s212 + $0x8] sm:$0xff] %v1713
      %1722 = vst [vmem:[%s212 + $0x10] sm:$0xff] %v1714
      %1723 = vst [vmem:[%s212 + $0x18] sm:$0xf] %v1715
      %p1724 = scmp.lt.s32.totalorder %s18, 1
      %s1725 = scalar_select %p1724, %s18, 1
      %p1726 = scmp.lt.s32.totalorder %s19, 0
      %s1727 = scalar_select %p1726, %s19, 0
      %s1728 = smul.addr %s1727, 7
      %s1729 = smul.addr %s1725, 7
      %s1730 = sadd.s32 %s1728, %s1729
      %s1731 = smul.addr %s1730, 4
      %s1732 = scalar_lea.vmem %s3, %s1731
      // Predicated region
      $region33: #{conv3d_block.1} parent=31 // pred_check
        %p1733 = pneg %p119
      $region34: #{conv3d_block.1} parent=31 // pred_check_branch
        %1735 = sbr.rel (%p1733) target = $region36
      $region35: #{conv3d_block.1} parent=31 // pred_region
        _
      $region36: #{conv3d_block.1} parent=31 // pred_fallthru
        _
    $region32: #{conv3d_block.1} parent=5 // pred_fallthru
      _
    %p1736 = scmp.le.s32.totalorder 2, %s9
    // Predicated region
    $region37: #{conv3d_block.1} parent=5 // pred_check
      %p1737 = pneg %p1736
    $region38: #{conv3d_block.1} parent=5 // pred_check_branch
      %1739 = sbr.rel (%p1737) target = $region40
    $region39: #{conv3d_block.1} parent=5 // pred_region
      %s1740 = ssub.s32 %s9, 2
      // Predicated region
      $region41: #{conv3d_block.1} parent=39 // pred_check
        %p1741 = pneg %p125
      $region42: #{conv3d_block.1} parent=39 // pred_check_branch
        %1743 = sbr.rel (%p1741) target = $region44
      $region43: #{conv3d_block.1} parent=39 // pred_region
        %p1744 = scmp.lt.s32.totalorder %s20, 1
        %s1745 = scalar_select %p1744, %s20, 1
        %p1746 = scmp.lt.s32.totalorder %s21, 0
        %s1747 = scalar_select %p1746, %s21, 0
        %s1748 = smul.addr %s1747, 7
        %s1749 = smul.addr %s1745, 7
        %s1750 = sadd.s32 %s1748, %s1749
        %s1751 = smul.addr %s1750, 4
        %s1752 = scalar_lea.vmem %s3, %s1751
      $region44: #{conv3d_block.1} parent=39 // pred_fallthru
        _
    $region40: #{conv3d_block.1} parent=5 // pred_fallthru
      _
  $region6: #{conv3d_block.1} parent=0 // loop_footer
    %s13 = sadd.s32 1, %s9
  $region7: #{conv3d_block.1} parent=0 // loop_footer_branch
    %8 = sbr.rel target = $region3
  $region8: #{conv3d_block.1} parent=0 // loop_exit
    _

</llo_original>
